<compile_context>
chip_gen: v5e
topology: v5e:2x2
jax: 0.10.0
libtpu: 0.0.40
codegen_flags: <defaults>
</compile_context>

<pallas_src>
import functools

import jax
import jax.numpy as jnp
from jax import lax
from jax.experimental import pallas as pl
from jax.experimental.pallas import tpu as pltpu

NEG = -1e30   # "minus infinity" pool padding (finite -> no inf*0 NaN hazards)
PAD0 = 8      # NEG front-pad rows in the conv scratch (keeps the big conv store 8-aligned)
PAD1 = 8      # NEG tail-pad rows (covers the +1-shifted read of the last hmax row)


# ----------------------------------------------------------------------------
# Fused kernel: conv (1 packed matmul) + separable 3x3/s2/p1 max-pool + BN affine
# ----------------------------------------------------------------------------
def fused_embed_kernel(x_ref, w_ref, scale_ref, shift_ref, o_ref,
                       conv_scr, hmax_scr, *, W, K, E, Ho, Wo, Hp, Wp):
    HM = 2 * (Hp + 1) * W                 # hmax rows (covers conv rows -1 .. 2*Hp)
    total = PAD0 + HM + PAD1              # conv scratch rows

    # ---- 1) conv as ONE matmul: pack the K*K taps along the contraction dim ----
    # packed[p, t*C + c] = x[p + kh*W + kw, c]  (t = kh*K + kw); 9 unit-stride
    # slices of the flattened input plane, concatenated along lanes (no HBM im2col).
    taps = [x_ref[0, kh * W + kw: kh * W + kw + Ho * W, :]
            for kh in range(K) for kw in range(K)]            # K*K x [Ho*W, C] bf16
    lhs = jnp.concatenate(taps, axis=1)                       # [Ho*W, K*K*C]
    acc = jnp.dot(lhs, w_ref[...],
                  preferred_element_type=jnp.float32)         # [Ho*W, E] f32

    # ---- 2) neutralise wrap-around columns (ow >= Wo) of the "wide" layout -----
    # mask is generated in-kernel (no colmask input / DMA / BlockSpec); single VPU
    # select over the value we are about to store anyway.
    col = lax.broadcasted_iota(jnp.int32, (Ho * W, E), 0) % W
    masked = jnp.where(col < Wo, acc, NEG)

    # ---- 3) border-only NEG init + single aligned store of the conv result -----
    conv_scr[0:PAD0 + W, :] = jnp.full((PAD0 + W, E), NEG, jnp.float32)       # row -1
    conv_scr[PAD0 + (Ho + 1) * W:total, :] = jnp.full(
        (total - (PAD0 + (Ho + 1) * W), E), NEG, jnp.float32)                 # rows >= Ho
    conv_scr[PAD0 + W:PAD0 + W + Ho * W, :] = masked                          # rows 0..Ho-1

    # ---- 4) separable max pool, stage 1: horizontal 3-max (full width, unit stride)
    left   = conv_scr[pl.ds(PAD0 - 1, HM), :]
    centre = conv_scr[pl.ds(PAD0,     HM), :]
    right  = conv_scr[pl.ds(PAD0 + 1, HM), :]
    hmax_scr[...] = jnp.maximum(jnp.maximum(left, centre), right)

    # ---- 5) stage 2: vertical 3-max; 3 big stride-2 loads cover ALL (ph, pw) ----
    # hmax flat index needed for output (ph, pw), tap dh:  (2*ph + dh)*W + 2*pw
    t0 = hmax_scr[pl.ds(0 * W, Hp * W, stride=2), :]
    t1 = hmax_scr[pl.ds(1 * W, Hp * W, stride=2), :]
    t2 = hmax_scr[pl.ds(2 * W, Hp * W, stride=2), :]
    vmax = jnp.maximum(jnp.maximum(t0, t1), t2)               # [Hp*W, E]

    # ---- 6) folded BN affine + ONE output store --------------------------------
    pooled = vmax.reshape(Hp, W, E)[:, :Wp, :]                # [Hp, Wp, E]
    o_ref[0, :, :, :] = (pooled * scale_ref[...] + shift_ref[...]).astype(o_ref.dtype)


# ----------------------------------------------------------------------------
# Wrapper (NCHW in / NCHW out, matching the PyTorch module; inference-mode BN)
# ----------------------------------------------------------------------------
def embedding_forward(x_nchw, params, *, patch_size=3, stride=1, padding=0,
                      eps=1e-5, compute_dtype=jnp.bfloat16):
    assert stride == 1 and padding == 0, "specialised to the module defaults"
    w, bias, gamma, beta, run_mean, run_var = params
    B, C, H, W = x_nchw.shape
    E = w.shape[0]
    K = patch_size
    Ho, Wo = H - K + 1, W - K + 1                      # conv (valid) output
    Hp = (Ho + 2 - 3) // 2 + 1                         # maxpool(3,2,pad=1) output
    Wp = (Wo + 2 - 3) // 2 + 1

    # Static in-bounds / layout guarantees for the VMEM scratch accesses
    # (VMEM OOB is not runtime-checked on TPU).
    HM = 2 * (Hp + 1) * W
    assert Ho >= 1 and Wo >= 1
    assert W % 8 == 0, "sublane-aligned conv-row stride (true for EleViT configs)"
    assert 2 * Wp <= W, "stage-2 column reads must stay inside each conv row"
    assert 2 * W + 2 * (Hp * W - 1) < HM, "stride-2 taps stay inside hmax scratch"
    assert (Ho + 1) * W <= HM + PAD1, "conv rows -1..Ho fit in the conv scratch"

    # Input prep (O(x) only: transpose + K-1 zero rows + flatten; no im2col blowup)
    x = jnp.transpose(x_nchw, (0, 2, 3, 1))                   # NHWC
    x = jnp.pad(x, ((0, 0), (0, K - 1), (0, 0), (0, 0)))      # bottom pad for wide conv
    x2 = x.reshape(B, (H + K - 1) * W, C).astype(compute_dtype)

    # Conv weight [E,C,K,K] -> packed [K*K*C, E]  (row t*C+c <-> tap t=(kh,kw), chan c)
    w_packed = jnp.transpose(w, (2, 3, 1, 0)).reshape(K * K * C, E).astype(compute_dtype)

    # Fold BN (inference) + conv bias:  out = maxpool(conv)*scale + shift
    # (exact: the conv bias is an additive per-channel constant, it commutes with max)
    scale = (gamma * lax.rsqrt(run_var + eps)).astype(jnp.float32)
    shift = (beta + (bias - run_mean) * scale).astype(jnp.float32)

    kernel = functools.partial(fused_embed_kernel,
                               W=W, K=K, E=E, Ho=Ho, Wo=Wo, Hp=Hp, Wp=Wp)

    out = pl.pallas_call(
        kernel,
        out_shape=jax.ShapeDtypeStruct((B, Hp, Wp, E), jnp.float32),
        grid=(B,),
        in_specs=[
            pl.BlockSpec((1, (H + K - 1) * W, C), lambda b: (b, 0, 0)),
            pl.BlockSpec((K * K * C, E), lambda b: (0, 0)),
            pl.BlockSpec((1, E), lambda b: (0, 0)),
            pl.BlockSpec((1, E), lambda b: (0, 0)),
        ],
        out_specs=pl.BlockSpec((1, Hp, Wp, E), lambda b: (b, 0, 0, 0)),
        scratch_shapes=[
            pltpu.VMEM((PAD0 + HM + PAD1, E), jnp.float32),   # NEG-padded conv rows
            pltpu.VMEM((HM, E), jnp.float32),                 # horizontal-max rows
        ],
        compiler_params=pltpu.CompilerParams(
            dimension_semantics=("parallel",),
            vmem_limit_bytes=32 * 1024 * 1024),
    )(x2, w_packed, scale.reshape(1, E), shift.reshape(1, E))

    return jnp.transpose(out, (0, 3, 1, 2))                   # NCHW [B, E, Hp, Wp]


# ----------------------------------------------------------------------------
# Pure-JAX reference (for correctness check)
# ----------------------------------------------------------------------------
def embedding_reference(x_nchw, params, *, eps=1e-5):
    w, bias, gamma, beta, run_mean, run_var = params
    conv = lax.conv_general_dilated(
        x_nchw, w, window_strides=(1, 1), padding="VALID",
        dimension_numbers=("NCHW", "OIHW", "NCHW"),
    ) + bias[None, :, None, None]
    pool = lax.reduce_window(
        conv, -jnp.inf, lax.max,
        window_dimensions=(1, 1, 3, 3), window_strides=(1, 1, 2, 2),
        padding=((0, 0), (0, 0), (1, 1), (1, 1)),
    )
    inv_std = lax.rsqrt(run_var + eps)
    return (pool - run_mean[None, :, None, None]) * (gamma * inv_std)[None, :, None, None] \
        + beta[None, :, None, None]


if __name__ == "__main__":
    B, C, H, W = 2, 4, 16, 16
    E, K = 32, 3

    key = jax.random.PRNGKey(0)
    k1, k2, k3, k4, k5, k6, kx = jax.random.split(key, 7)

    # deterministic synthetic parameters (shapes match nn.Conv2d / nn.BatchNorm2d)
    w = jax.random.normal(k1, (E, C, K, K), jnp.float32) * 0.1      # conv weight [E,C,K,K]
    bias = jax.random.normal(k2, (E,), jnp.float32) * 0.1           # conv bias
    gamma = 1.0 + 0.1 * jax.random.normal(k3, (E,), jnp.float32)    # BN weight
    beta = 0.05 * jax.random.normal(k4, (E,), jnp.float32)          # BN bias
    run_mean = 0.1 * jax.random.normal(k5, (E,), jnp.float32)       # BN running_mean
    run_var = jax.random.uniform(k6, (E,), jnp.float32, 0.5, 1.5)   # BN running_var
    params = (w, bias, gamma, beta, run_mean, run_var)

    x = jax.random.normal(kx, (B, C, H, W), jnp.float32)            # NCHW, like PyTorch

    out = jax.block_until_ready(embedding_forward(x, params))
    ref = embedding_reference(x, params)

    assert out.shape == (B, E, 7, 7), out.shape
    # bf16 matmul operands (f32 accumulation) -> loosened tolerance vs the f32 reference
    max_err = float(jnp.max(jnp.abs(out - ref)))
    assert jnp.allclose(out, ref, rtol=5e-2, atol=5e-2), max_err

    print("KERNEL_OK")
</pallas_src>

<mosaic_0001>
module attributes {stable_mosaic.version = 11 : i64} {
  func.func @fused_embed_kernel(%arg0: i32, %arg1: memref<1x288x4xbf16, #tpu.memory_space<vmem>>, %arg2: memref<36x32xbf16, #tpu.memory_space<vmem>>, %arg3: memref<1x32xf32, #tpu.memory_space<vmem>>, %arg4: memref<1x32xf32, #tpu.memory_space<vmem>>, %arg5: memref<1x7x7x32xf32, #tpu.memory_space<vmem>>, %arg6: memref<272x32xf32, #tpu.memory_space<vmem>>, %arg7: memref<256x32xf32, #tpu.memory_space<vmem>>) attributes {dimension_semantics = [#tpu.dimension_semantics<parallel>], iteration_bounds = array<i64: 2>, scalar_prefetch = 0 : i64, scratch_operands = 2 : i64, tpu.core_type = #tpu.core_type<tc>, window_params = [{transform_indices = @transform_0, window_bounds = array<i64: 1, 288, 4>}, {pipeline_mode = #tpu.pipeline_mode<synchronous>, transform_indices = @transform_1, window_bounds = array<i64: 36, 32>}, {pipeline_mode = #tpu.pipeline_mode<synchronous>, transform_indices = @transform_2, window_bounds = array<i64: 1, 32>}, {pipeline_mode = #tpu.pipeline_mode<synchronous>, transform_indices = @transform_3, window_bounds = array<i64: 1, 32>}, {transform_indices = @transform_4, window_bounds = array<i64: 1, 7, 7, 32>}]} {
    %c0 = arith.constant 0 : index
    %c0_0 = arith.constant 0 : index
    %c0_1 = arith.constant 0 : index
    %0 = vector.load %arg1[%c0, %c0_0, %c0_1] : memref<1x288x4xbf16, #tpu.memory_space<vmem>>, vector<1x224x4xbf16>
    %1 = vector.shape_cast %0 : vector<1x224x4xbf16> to vector<224x4xbf16>
    %c0_2 = arith.constant 0 : index
    %c1 = arith.constant 1 : index
    %c0_3 = arith.constant 0 : index
    %2 = vector.load %arg1[%c0_2, %c1, %c0_3] : memref<1x288x4xbf16, #tpu.memory_space<vmem>>, vector<1x224x4xbf16>
    %3 = vector.shape_cast %2 : vector<1x224x4xbf16> to vector<224x4xbf16>
    %c0_4 = arith.constant 0 : index
    %c2 = arith.constant 2 : index
    %c0_5 = arith.constant 0 : index
    %4 = vector.load %arg1[%c0_4, %c2, %c0_5] : memref<1x288x4xbf16, #tpu.memory_space<vmem>>, vector<1x224x4xbf16>
    %5 = vector.shape_cast %4 : vector<1x224x4xbf16> to vector<224x4xbf16>
    %c0_6 = arith.constant 0 : index
    %c16 = arith.constant 16 : index
    %c0_7 = arith.constant 0 : index
    %6 = vector.load %arg1[%c0_6, %c16, %c0_7] : memref<1x288x4xbf16, #tpu.memory_space<vmem>>, vector<1x224x4xbf16>
    %7 = vector.shape_cast %6 : vector<1x224x4xbf16> to vector<224x4xbf16>
    %c0_8 = arith.constant 0 : index
    %c17 = arith.constant 17 : index
    %c0_9 = arith.constant 0 : index
    %8 = vector.load %arg1[%c0_8, %c17, %c0_9] : memref<1x288x4xbf16, #tpu.memory_space<vmem>>, vector<1x224x4xbf16>
    %9 = vector.shape_cast %8 : vector<1x224x4xbf16> to vector<224x4xbf16>
    %c0_10 = arith.constant 0 : index
    %c18 = arith.constant 18 : index
    %c0_11 = arith.constant 0 : index
    %10 = vector.load %arg1[%c0_10, %c18, %c0_11] : memref<1x288x4xbf16, #tpu.memory_space<vmem>>, vector<1x224x4xbf16>
    %11 = vector.shape_cast %10 : vector<1x224x4xbf16> to vector<224x4xbf16>
    %c0_12 = arith.constant 0 : index
    %c32 = arith.constant 32 : index
    %c0_13 = arith.constant 0 : index
    %12 = vector.load %arg1[%c0_12, %c32, %c0_13] : memref<1x288x4xbf16, #tpu.memory_space<vmem>>, vector<1x224x4xbf16>
    %13 = vector.shape_cast %12 : vector<1x224x4xbf16> to vector<224x4xbf16>
    %c0_14 = arith.constant 0 : index
    %c33 = arith.constant 33 : index
    %c0_15 = arith.constant 0 : index
    %14 = vector.load %arg1[%c0_14, %c33, %c0_15] : memref<1x288x4xbf16, #tpu.memory_space<vmem>>, vector<1x224x4xbf16>
    %15 = vector.shape_cast %14 : vector<1x224x4xbf16> to vector<224x4xbf16>
    %c0_16 = arith.constant 0 : index
    %c34 = arith.constant 34 : index
    %c0_17 = arith.constant 0 : index
    %16 = vector.load %arg1[%c0_16, %c34, %c0_17] : memref<1x288x4xbf16, #tpu.memory_space<vmem>>, vector<1x224x4xbf16>
    %17 = vector.shape_cast %16 : vector<1x224x4xbf16> to vector<224x4xbf16>
    %18 = tpu.concatenate %1, %3, %5, %7, %9, %11, %13, %15, %17 in 1 : vector<224x4xbf16>, vector<224x4xbf16>, vector<224x4xbf16>, vector<224x4xbf16>, vector<224x4xbf16>, vector<224x4xbf16>, vector<224x4xbf16>, vector<224x4xbf16>, vector<224x4xbf16> -> vector<224x36xbf16>
    %c0_18 = arith.constant 0 : index
    %c0_19 = arith.constant 0 : index
    %19 = vector.load %arg2[%c0_18, %c0_19] : memref<36x32xbf16, #tpu.memory_space<vmem>>, vector<36x32xbf16>
    %cst = arith.constant dense<0.000000e+00> : vector<224x32xf32>
    %20 = tpu.matmul %18, %19, %cst {dimension_numbers = #tpu.dot_dimension_numbers<[1], [0], [0], [1], [0, 0, 1, 1], [], []>} : vector<224x36xbf16>, vector<36x32xbf16>, vector<224x32xf32> -> vector<224x32xf32>
    %21 = tpu.iota {dimensions = array<i32: 0>} : vector<224x32xi32>
    %c16_i32 = arith.constant 16 : i32
    %c0_i32 = arith.constant 0 : i32
    %22 = arith.cmpi eq, %c16_i32, %c0_i32 : i32
    %c1_i32 = arith.constant 1 : i32
    %23 = arith.select %22, %c1_i32, %c16_i32 : i32
    %24 = vector.broadcast %23 : i32 to vector<224x32xi32>
    %25 = arith.remsi %21, %24 : vector<224x32xi32>
    %c0_i32_20 = arith.constant 0 : i32
    %26 = vector.broadcast %c0_i32_20 : i32 to vector<224x32xi32>
    %27 = arith.cmpi ne, %25, %26 : vector<224x32xi32>
    %c0_i32_21 = arith.constant 0 : i32
    %28 = vector.broadcast %c0_i32_21 : i32 to vector<224x32xi32>
    %29 = arith.cmpi slt, %25, %28 : vector<224x32xi32>
    %c0_i32_22 = arith.constant 0 : i32
    %30 = arith.cmpi slt, %23, %c0_i32_22 : i32
    %31 = vector.broadcast %30 : i1 to vector<224x32xi1>
    %32 = vector.broadcast %31 : vector<224x32xi1> to vector<224x32xi1>
    %33 = arith.xori %29, %32 : vector<224x32xi1>
    %34 = arith.andi %33, %27 : vector<224x32xi1>
    %35 = vector.broadcast %23 : i32 to vector<224x32xi32>
    %36 = arith.addi %25, %35 : vector<224x32xi32>
    %37 = arith.select %34, %36, %25 : vector<224x32xi1>, vector<224x32xi32>
    %c14_i32 = arith.constant 14 : i32
    %38 = vector.broadcast %c14_i32 : i32 to vector<224x32xi32>
    %39 = arith.cmpi slt, %37, %38 : vector<224x32xi32>
    %cst_23 = arith.constant -1.000000e+30 : f32
    %40 = vector.broadcast %cst_23 : f32 to vector<224x32xf32>
    %41 = arith.select %39, %20, %40 : vector<224x32xi1>, vector<224x32xf32>
    %cst_24 = arith.constant -1.000000e+30 : f32
    %42 = vector.broadcast %cst_24 : f32 to vector<24x32xf32>
    %c0_25 = arith.constant 0 : index
    %c0_26 = arith.constant 0 : index
    %43 = vector.load %arg6[%c0_25, %c0_26] : memref<272x32xf32, #tpu.memory_space<vmem>>, vector<24x32xf32>
    tpu.vector_store %arg6[%c0_25, %c0_26], %42 {strides = array<i32>} : memref<272x32xf32, #tpu.memory_space<vmem>>, vector<24x32xf32>,
    %cst_27 = arith.constant -1.000000e+30 : f32
    %44 = vector.broadcast %cst_27 : f32 to vector<24x32xf32>
    %c248 = arith.constant 248 : index
    %c0_28 = arith.constant 0 : index
    %45 = vector.load %arg6[%c248, %c0_28] : memref<272x32xf32, #tpu.memory_space<vmem>>, vector<24x32xf32>
    tpu.vector_store %arg6[%c248, %c0_28], %44 {strides = array<i32>} : memref<272x32xf32, #tpu.memory_space<vmem>>, vector<24x32xf32>,
    %c24 = arith.constant 24 : index
    %c0_29 = arith.constant 0 : index
    %46 = vector.load %arg6[%c24, %c0_29] : memref<272x32xf32, #tpu.memory_space<vmem>>, vector<224x32xf32>
    tpu.vector_store %arg6[%c24, %c0_29], %41 {strides = array<i32>} : memref<272x32xf32, #tpu.memory_space<vmem>>, vector<224x32xf32>,
    %c7 = arith.constant 7 : index
    %c0_30 = arith.constant 0 : index
    %47 = vector.load %arg6[%c7, %c0_30] : memref<272x32xf32, #tpu.memory_space<vmem>>, vector<256x32xf32>
    %c8 = arith.constant 8 : index
    %c0_31 = arith.constant 0 : index
    %48 = vector.load %arg6[%c8, %c0_31] : memref<272x32xf32, #tpu.memory_space<vmem>>, vector<256x32xf32>
    %c9 = arith.constant 9 : index
    %c0_32 = arith.constant 0 : index
    %49 = vector.load %arg6[%c9, %c0_32] : memref<272x32xf32, #tpu.memory_space<vmem>>, vector<256x32xf32>
    %50 = arith.maximumf %47, %48 : vector<256x32xf32>
    %51 = arith.maximumf %50, %49 : vector<256x32xf32>
    %c0_33 = arith.constant 0 : index
    %c0_34 = arith.constant 0 : index
    %52 = vector.load %arg7[%c0_33, %c0_34] : memref<256x32xf32, #tpu.memory_space<vmem>>, vector<256x32xf32>
    tpu.vector_store %arg7[%c0_33, %c0_34], %51 {strides = array<i32>} : memref<256x32xf32, #tpu.memory_space<vmem>>, vector<256x32xf32>,
    %c0_35 = arith.constant 0 : index
    %c0_36 = arith.constant 0 : index
    %53 = tpu.strided_load %arg7[%c0_35, %c0_36] {strides = array<i32: 2, 1>} : memref<256x32xf32, #tpu.memory_space<vmem>>, vector<112x32xf32>
    %c16_37 = arith.constant 16 : index
    %c0_38 = arith.constant 0 : index
    %54 = tpu.strided_load %arg7[%c16_37, %c0_38] {strides = array<i32: 2, 1>} : memref<256x32xf32, #tpu.memory_space<vmem>>, vector<112x32xf32>
    %c32_39 = arith.constant 32 : index
    %c0_40 = arith.constant 0 : index
    %55 = tpu.strided_load %arg7[%c32_39, %c0_40] {strides = array<i32: 2, 1>} : memref<256x32xf32, #tpu.memory_space<vmem>>, vector<112x32xf32>
    %56 = arith.maximumf %53, %54 : vector<112x32xf32>
    %57 = arith.maximumf %56, %55 : vector<112x32xf32>
    %58 = vector.shape_cast %57 : vector<112x32xf32> to vector<7x16x32xf32>
    %59 = vector.extract_strided_slice %58 {offsets = [0, 0, 0], sizes = [7, 7, 32], strides = [1, 1, 1]} : vector<7x16x32xf32> to vector<7x7x32xf32>
    %c0_41 = arith.constant 0 : index
    %c0_42 = arith.constant 0 : index
    %60 = vector.load %arg3[%c0_41, %c0_42] : memref<1x32xf32, #tpu.memory_space<vmem>>, vector<1x32xf32>
    %61 = vector.shape_cast %60 : vector<1x32xf32> to vector<1x1x32xf32>
    %62 = vector.broadcast %61 : vector<1x1x32xf32> to vector<7x7x32xf32>
    %63 = arith.mulf %59, %62 : vector<7x7x32xf32>
    %c0_43 = arith.constant 0 : index
    %c0_44 = arith.constant 0 : index
    %64 = vector.load %arg4[%c0_43, %c0_44] : memref<1x32xf32, #tpu.memory_space<vmem>>, vector<1x32xf32>
    %65 = vector.shape_cast %64 : vector<1x32xf32> to vector<1x1x32xf32>
    %66 = vector.broadcast %65 : vector<1x1x32xf32> to vector<7x7x32xf32>
    %67 = arith.addf %63, %66 : vector<7x7x32xf32>
    %c0_45 = arith.constant 0 : index
    %c0_46 = arith.constant 0 : index
    %c0_47 = arith.constant 0 : index
    %c0_48 = arith.constant 0 : index
    %68 = vector.load %arg5[%c0_45, %c0_46, %c0_47, %c0_48] : memref<1x7x7x32xf32, #tpu.memory_space<vmem>>, vector<1x7x7x32xf32>
    %69 = vector.shape_cast %68 : vector<1x7x7x32xf32> to vector<7x7x32xf32>
    %70 = vector.shape_cast %67 : vector<7x7x32xf32> to vector<1x7x7x32xf32>
    tpu.vector_store %arg5[%c0_45, %c0_46, %c0_47, %c0_48], %70 {strides = array<i32>} : memref<1x7x7x32xf32, #tpu.memory_space<vmem>>, vector<1x7x7x32xf32>,
    return
  }
  func.func @transform_0(%arg0: i32) -> (i32, i32, i32) {
    %c0_i32 = arith.constant 0 : i32
    %c0_i32_0 = arith.constant 0 : i32
    %c0_i32_1 = arith.constant 0 : i32
    return %arg0, %c0_i32, %c0_i32_0 : i32, i32, i32
  }
  func.func @transform_1(%arg0: i32) -> (i32, i32) {
    %c0_i32 = arith.constant 0 : i32
    %c0_i32_0 = arith.constant 0 : i32
    %c0_i32_1 = arith.constant 0 : i32
    return %c0_i32, %c0_i32_0 : i32, i32
  }
  func.func @transform_2(%arg0: i32) -> (i32, i32) {
    %c0_i32 = arith.constant 0 : i32
    %c0_i32_0 = arith.constant 0 : i32
    %c0_i32_1 = arith.constant 0 : i32
    return %c0_i32, %c0_i32_0 : i32, i32
  }
  func.func @transform_3(%arg0: i32) -> (i32, i32) {
    %c0_i32 = arith.constant 0 : i32
    %c0_i32_0 = arith.constant 0 : i32
    %c0_i32_1 = arith.constant 0 : i32
    return %c0_i32, %c0_i32_0 : i32, i32
  }
  func.func @transform_4(%arg0: i32) -> (i32, i32, i32, i32) {
    %c0_i32 = arith.constant 0 : i32
    %c0_i32_0 = arith.constant 0 : i32
    %c0_i32_1 = arith.constant 0 : i32
    %c0_i32_2 = arith.constant 0 : i32
    return %arg0, %c0_i32, %c0_i32_0, %c0_i32_1 : i32, i32, i32, i32
  }
}

</mosaic_0001>

<llo_original>
// kernel: tpu_custom_call.1
$region0: #{tpu_custom_call.1}
  #allocation0 [shape = 'u32[]', space=smem, size = 0x4, offset = 0x4, fixed_abs, tag = 'smem constant byte address 0x4 - core index']
  #allocation1 [shape = 'u32[72,128]{1,0:T(1,128)}', space=vmem, size = 0x9000, scoped, tag = 'internal scratch']
  #allocation2 [shape = 'f32[272,32]{1,0:T(8,128)}', space=vmem, size = 0x22000, scoped, tag = 'scratch operand']
  #allocation3 [shape = 'f32[256,32]{1,0:T(8,128)}', space=vmem, size = 0x20000, scoped, tag = 'scratch operand']
  %s0 = inlined_call_operand.vmem [shape: bf16[2,288,4], index: 0, kind: input, shape index: {}]
  %s1 = inlined_call_operand.vmem [shape: bf16[36,32], index: 1, kind: input, shape index: {}]
  %s2 = inlined_call_operand.vmem [shape: f32[1,32], index: 2, kind: input, shape index: {}]
  %s3 = inlined_call_operand.vmem [shape: f32[1,32], index: 3, kind: input, shape index: {}]
  %s4 = inlined_call_operand.vmem [shape: f32[2,7,7,32], index: 4, kind: output, shape index: {}]
  %s5 = sld [smem:[#allocation0]]
  $region49: #{tpu_custom_call.1} parent=0
    _
  %s7 = ssub.s32 1, %s5
  %s8 = scalar_select 0, %s7, %s5
  loop: start=0, step=1, limit=4
  $region2: #{tpu_custom_call.1} parent=0 // loop_pre_header
    _
  $region3: #{tpu_custom_call.1} parent=0 // loop_header
    %s10 = sphi 0, %s14
    %p11 = scmp.ge.s32.totalorder %s10, 4
    %s20 = sphi 0, %s22
    %s23 = sphi 0, %s20
    %s24 = sphi 0, %s23
    %s40 = sphi 0, %s24
    %s44 = sphi 0, %s44
    %s46 = sphi 0, %s44
    %s47 = sphi 0, %s46
    %s61 = sphi 0, %s47
    %s65 = sphi 0, %s65
    %s67 = sphi 0, %s65
    %s68 = sphi 0, %s67
    %s82 = sphi 0, %s68
    %s86 = sphi 0, %s86
    %s88 = sphi 0, %s86
    %s89 = sphi 0, %s88
    %s103 = sphi 0, %s89
    %s109 = sphi 0, %s111
    %s112 = sphi 0, %s109
    %s113 = sphi 0, %s112
    %s129 = sphi 0, %s113
  $region4: #{tpu_custom_call.1} parent=0 // loop_header_branch
    %13 = sbr.rel (%p11) target = $region8
  $region5: #{tpu_custom_call.1} parent=0 // loop_body
    %s15 = ssub.s32 %s10, 1
    %s16 = ssub.s32 %s10, 2
    %s17 = sadd.s32 %s10, 1
    %s18 = ssub.s32 %s10, %s17
    %p19 = scmp.eq.s32.totalorder %s18, 0
    %s21 = sadd.s32 %s20, 1
    %s22 = scalar_select %p19, %s20, %s21
    %p25 = pneg %p19
    %p26 = scmp.eq.s32.totalorder %s10, 1
    %p27 = por %p25, %p26
    %p28 = scmp.ne.s32.totalorder %s20, %s23
    %p29 = scmp.eq.s32.totalorder %s10, 0
    %p30 = por %p28, %p29
    %p31 = scmp.ne.s32.totalorder %s20, %s23
    %p32 = scmp.eq.s32.totalorder %s15, 1
    %p33 = por %p31, %p32
    %p34 = scmp.ne.s32.totalorder %s23, %s24
    %p35 = scmp.eq.s32.totalorder %s15, 0
    %p36 = por %p34, %p35
    %p37 = scmp.ne.s32.totalorder %s23, %s24
    %p38 = scmp.eq.s32.totalorder %s16, 1
    %p39 = por %p37, %p38
    %p41 = scmp.ne.s32.totalorder %s24, %s40
    %p42 = scmp.eq.s32.totalorder %s16, 0
    %p43 = por %p41, %p42
    %s45 = sadd.s32 %s44, 1
    %p48 = scmp.eq.s32.totalorder %s10, 1
    %p49 = scmp.ne.s32.totalorder %s44, %s46
    %p50 = scmp.eq.s32.totalorder %s10, 0
    %p51 = por %p49, %p50
    %p52 = scmp.ne.s32.totalorder %s44, %s46
    %p53 = scmp.eq.s32.totalorder %s15, 1
    %p54 = por %p52, %p53
    %p55 = scmp.ne.s32.totalorder %s46, %s47
    %p56 = scmp.eq.s32.totalorder %s15, 0
    %p57 = por %p55, %p56
    %p58 = scmp.ne.s32.totalorder %s46, %s47
    %p59 = scmp.eq.s32.totalorder %s16, 1
    %p60 = por %p58, %p59
    %p62 = scmp.ne.s32.totalorder %s47, %s61
    %p63 = scmp.eq.s32.totalorder %s16, 0
    %p64 = por %p62, %p63
    %s66 = sadd.s32 %s65, 1
    %p69 = scmp.eq.s32.totalorder %s10, 1
    %p70 = scmp.ne.s32.totalorder %s65, %s67
    %p71 = scmp.eq.s32.totalorder %s10, 0
    %p72 = por %p70, %p71
    %p73 = scmp.ne.s32.totalorder %s65, %s67
    %p74 = scmp.eq.s32.totalorder %s15, 1
    %p75 = por %p73, %p74
    %p76 = scmp.ne.s32.totalorder %s67, %s68
    %p77 = scmp.eq.s32.totalorder %s15, 0
    %p78 = por %p76, %p77
    %p79 = scmp.ne.s32.totalorder %s67, %s68
    %p80 = scmp.eq.s32.totalorder %s16, 1
    %p81 = por %p79, %p80
    %p83 = scmp.ne.s32.totalorder %s68, %s82
    %p84 = scmp.eq.s32.totalorder %s16, 0
    %p85 = por %p83, %p84
    %s87 = sadd.s32 %s86, 1
    %p90 = scmp.eq.s32.totalorder %s10, 1
    %p91 = scmp.ne.s32.totalorder %s86, %s88
    %p92 = scmp.eq.s32.totalorder %s10, 0
    %p93 = por %p91, %p92
    %p94 = scmp.ne.s32.totalorder %s86, %s88
    %p95 = scmp.eq.s32.totalorder %s15, 1
    %p96 = por %p94, %p95
    %p97 = scmp.ne.s32.totalorder %s88, %s89
    %p98 = scmp.eq.s32.totalorder %s15, 0
    %p99 = por %p97, %p98
    %p100 = scmp.ne.s32.totalorder %s88, %s89
    %p101 = scmp.eq.s32.totalorder %s16, 1
    %p102 = por %p100, %p101
    %p104 = scmp.ne.s32.totalorder %s89, %s103
    %p105 = scmp.eq.s32.totalorder %s16, 0
    %p106 = por %p104, %p105
    %s107 = ssub.s32 %s10, %s17
    %p108 = scmp.eq.s32.totalorder %s107, 0
    %s110 = sadd.s32 %s109, 1
    %s111 = scalar_select %p108, %s109, %s110
    %p114 = pneg %p108
    %p115 = scmp.eq.s32.totalorder %s10, 1
    %p116 = por %p114, %p115
    %p117 = scmp.ne.s32.totalorder %s109, %s112
    %p118 = scmp.eq.s32.totalorder %s10, 0
    %p119 = por %p117, %p118
    %p120 = scmp.ne.s32.totalorder %s109, %s112
    %p121 = scmp.eq.s32.totalorder %s15, 1
    %p122 = por %p120, %p121
    %p123 = scmp.ne.s32.totalorder %s112, %s113
    %p124 = scmp.eq.s32.totalorder %s15, 0
    %p125 = por %p123, %p124
    %p126 = scmp.ne.s32.totalorder %s112, %s113
    %p127 = scmp.eq.s32.totalorder %s16, 1
    %p128 = por %p126, %p127
    %p130 = scmp.ne.s32.totalorder %s113, %s129
    %p131 = scmp.eq.s32.totalorder %s16, 0
    %p132 = por %p130, %p131
    %p133 = scmp.le.s32.totalorder 1, %s10
    %p134 = scmp.lt.s32.totalorder %s10, 3
    %p135 = pnand %p133, %p134
    %p136 = pneg %p135
    // Predicated region
    $region9: #{tpu_custom_call.1} parent=5 // pred_check
      _
    $region10: #{tpu_custom_call.1} parent=5 // pred_check_branch
      %138 = sbr.rel (%p135) target = $region12
    $region11: #{tpu_custom_call.1} parent=5 // pred_region
      %s139 = ssub.s32 %s10, 1
      // Predicated region
      $region13: #{tpu_custom_call.1} parent=11 // pred_check
        %p140 = pneg %p57
      $region14: #{tpu_custom_call.1} parent=11 // pred_check_branch
        %142 = sbr.rel (%p140) target = $region16
      $region15: #{tpu_custom_call.1} parent=11 // pred_region
        _
      $region16: #{tpu_custom_call.1} parent=11 // pred_fallthru
        _
      // Predicated region
      $region17: #{tpu_custom_call.1} parent=11 // pred_check
        %p143 = pneg %p78
      $region18: #{tpu_custom_call.1} parent=11 // pred_check_branch
        %145 = sbr.rel (%p143) target = $region20
      $region19: #{tpu_custom_call.1} parent=11 // pred_region
        _
      $region20: #{tpu_custom_call.1} parent=11 // pred_fallthru
        _
      // Predicated region
      $region21: #{tpu_custom_call.1} parent=11 // pred_check
        %p146 = pneg %p99
      $region22: #{tpu_custom_call.1} parent=11 // pred_check_branch
        %148 = sbr.rel (%p146) target = $region24
      $region23: #{tpu_custom_call.1} parent=11 // pred_region
        _
      $region24: #{tpu_custom_call.1} parent=11 // pred_fallthru
        _
    $region12: #{tpu_custom_call.1} parent=5 // pred_fallthru
      _
    %p149 = scmp.lt.s32.totalorder %s10, 2
    // Predicated region
    $region25: #{tpu_custom_call.1} parent=5 // pred_check
      %p150 = pneg %p149
    $region26: #{tpu_custom_call.1} parent=5 // pred_check_branch
      %152 = sbr.rel (%p150) target = $region28
    $region27: #{tpu_custom_call.1} parent=5 // pred_region
      // Predicated region
      $region29: #{tpu_custom_call.1} parent=27 // pred_check
        %p153 = pneg %p30
      $region30: #{tpu_custom_call.1} parent=27 // pred_check_branch
        %155 = sbr.rel (%p153) target = $region32
      $region31: #{tpu_custom_call.1} parent=27 // pred_region
        %p156 = scmp.lt.s32.totalorder %s10, 1
        %s157 = scalar_select %p156, %s10, 1
        %s158 = smul.addr %s157, 36
        %s159 = smul.addr %s158, 4
        %s160 = scalar_lea.vmem %s0, %s159
      $region32: #{tpu_custom_call.1} parent=27 // pred_fallthru
        _
    $region28: #{tpu_custom_call.1} parent=5 // pred_fallthru
      _
    %p161 = scmp.le.s32.totalorder 1, %s10
    %p162 = scmp.lt.s32.totalorder %s10, 3
    %p163 = pnand %p161, %p162
    %p164 = pneg %p163
    // Predicated region
    $region33: #{tpu_custom_call.1} parent=5 // pred_check
      _
    $region34: #{tpu_custom_call.1} parent=5 // pred_check_branch
      %166 = sbr.rel (%p163) target = $region36
    $region35: #{tpu_custom_call.1} parent=5 // pred_region
      %s167 = ssub.s32 %s10, 1
      %p168 = scmp.lt.s32.totalorder %s15, 1
      %s169 = scalar_select %p168, %s15, 1
      %s170 = smul.addr %s169, 36
      %s171 = smul.addr %s170, 4
      %s172 = scalar_lea.vmem %s0, %s171
      %p173 = pneg %p36
      %p174 = pneg %p33
      %p175 = pneg %p57
      %p176 = pneg %p54
      %p177 = pneg %p78
      %p178 = pneg %p75
      %p179 = pneg %p99
      %p180 = pneg %p96
      %p181 = pneg %p125
      %p182 = pneg %p122
      %p183 = scmp.lt.s32.totalorder %s15, 1
      %s184 = scalar_select %p183, %s15, 1
      %s185 = smul.addr %s184, 7
      %s186 = smul.addr %s185, 8
      %s187 = scalar_lea.vmem %s4, %s186
      %p188 = scmp.lt.s32.totalorder %s15, 1
      %s189 = scalar_select %p188, %s15, 1
      %s190 = smul.addr %s189, 36
      %s191 = smul.addr %s190, 4
      %s192 = scalar_lea.vmem %s0, %s191
      %p193 = scmp.lt.s32.totalorder %s15, 1
      %s194 = scalar_select %p193, %s15, 1
      %s195 = smul.addr %s194, 7
      %s196 = smul.addr %s195, 8
      %s197 = scalar_lea.vmem %s4, %s196
      %v199 = vld [vmem:[%s192] sm:$0xf]
      %v200 = vld [vmem:[%s192 + $0x4] sm:$0xf]
      %v201 = vld [vmem:[%s192 + $0x8] sm:$0xf]
      %v202 = vld [vmem:[%s192 + $0xc] sm:$0xf]
      %v203 = vld [vmem:[%s192 + $0x10] sm:$0xf]
      %v204 = vld [vmem:[%s192 + $0x14] sm:$0xf]
      %v205 = vld [vmem:[%s192 + $0x18] sm:$0xf]
      %v206 = vld [vmem:[%s192 + $0x1c] sm:$0xf]
      %v207 = vld [vmem:[%s192 + $0x20] sm:$0xf]
      %v208 = vld [vmem:[%s192 + $0x24] sm:$0xf]
      %v209 = vld [vmem:[%s192 + $0x28] sm:$0xf]
      %v210 = vld [vmem:[%s192 + $0x2c] sm:$0xf]
      %v211 = vld [vmem:[%s192 + $0x30] sm:$0xf]
      %v212 = vld [vmem:[%s192 + $0x34] sm:$0xf]
      %v213 = vld [vmem:[%s192 + $0x38] sm:$0xf]
      %v214 = vld [vmem:[%s192 + $0x3c] sm:$0xf]
      %v215 = vld [vmem:[%s192 + $0x40] sm:$0xf]
      %v216 = vld [vmem:[%s192 + $0x44] sm:$0xf]
      %v217 = vld [vmem:[%s192 + $0x48] sm:$0xf]
      %v218 = vld [vmem:[%s192 + $0x4c] sm:$0xf]
      %v219 = vld [vmem:[%s192 + $0x50] sm:$0xf]
      %v220 = vld [vmem:[%s192 + $0x54] sm:$0xf]
      %v221 = vld [vmem:[%s192 + $0x58] sm:$0xf]
      %v222 = vld [vmem:[%s192 + $0x5c] sm:$0xf]
      %v223 = vld [vmem:[%s192 + $0x60] sm:$0xf]
      %v224 = vld [vmem:[%s192 + $0x64] sm:$0xf]
      %v225 = vld [vmem:[%s192 + $0x68] sm:$0xf]
      %v226 = vld [vmem:[%s192 + $0x6c] sm:$0xf]
      %v227 = vld [vmem:[%s192 + $0x70] sm:$0x1]
      %v228 = vld [vmem:[%s192] sm:$0xe]
      %v229 = vld [vmem:[%s192 + $0x70] sm:$0xf]
      %v230 = vld [vmem:[%s192 + $0x74] sm:$0xf]
      %v231 = vld [vmem:[%s192 + $0x78] sm:$0x1]
      %v232 = vld [vmem:[%s192 + $0x8] sm:$0xe]
      %v233 = vld [vmem:[%s192 + $0x78] sm:$0xf]
      %v234 = vld [vmem:[%s192 + $0x7c] sm:$0xf]
      %v235 = vld [vmem:[%s192 + $0x80] sm:$0x1]
      %v236 = vld [vmem:[%s192 + $0x10] sm:$0xe]
      %v265 = vunpack.c.l.b16 %v199
      %v266 = vunpack.c.l.b16 %v200
      %v267 = vunpack.c.l.b16 %v201
      %v268 = vunpack.c.l.b16 %v202
      %v269 = vunpack.c.l.b16 %v203
      %v270 = vunpack.c.l.b16 %v204
      %v271 = vunpack.c.l.b16 %v205
      %v272 = vunpack.c.l.b16 %v206
      %v273 = vunpack.c.l.b16 %v207
      %v274 = vunpack.c.l.b16 %v208
      %v275 = vunpack.c.l.b16 %v209
      %v276 = vunpack.c.l.b16 %v210
      %v277 = vunpack.c.l.b16 %v211
      %v278 = vunpack.c.l.b16 %v212
      %v279 = vunpack.c.l.b16 %v213
      %v280 = vunpack.c.l.b16 %v214
      %v281 = vunpack.c.l.b16 %v215
      %v282 = vunpack.c.l.b16 %v216
      %v283 = vunpack.c.l.b16 %v217
      %v284 = vunpack.c.l.b16 %v218
      %v285 = vunpack.c.l.b16 %v219
      %v286 = vunpack.c.l.b16 %v220
      %v287 = vunpack.c.l.b16 %v221
      %v288 = vunpack.c.l.b16 %v222
      %v289 = vunpack.c.l.b16 %v223
      %v290 = vunpack.c.l.b16 %v224
      %v291 = vunpack.c.l.b16 %v225
      %v292 = vunpack.c.l.b16 %v226
      %v293 = vpack.c.b16 %v266, %v265
      %v294 = vpack.c.b16 %v268, %v267
      %v295 = vpack.c.b16 %v270, %v269
      %v296 = vpack.c.b16 %v272, %v271
      %v297 = vpack.c.b16 %v274, %v273
      %v298 = vpack.c.b16 %v276, %v275
      %v299 = vpack.c.b16 %v278, %v277
      %v300 = vpack.c.b16 %v280, %v279
      %v301 = vpack.c.b16 %v282, %v281
      %v302 = vpack.c.b16 %v284, %v283
      %v303 = vpack.c.b16 %v286, %v285
      %v304 = vpack.c.b16 %v288, %v287
      %v305 = vpack.c.b16 %v290, %v289
      %v306 = vpack.c.b16 %v292, %v291
      %v308 = vunpack.c.l.b16 %v227
      %v309 = vpack.c.b16 %v308, %v308
      %vm310 = vsmask.f32 7424
      %v312 = vshrl.u32 %v293, 16
      %v314 = vshll.u32 %v293, 16
      %v316 = vrot.slane %v314, 1
      %v317 = vor.u32 %v312, %v316
      %v319 = vshll.u32 %v294, 16
      %v321 = vrot.slane %v319, 1
      %v322 = vsel %vm310, %v317, %v321
      %v323 = vshrl.u32 %v294, 16
      %v325 = vor.u32 %v323, %v321
      %v327 = vshll.u32 %v295, 16
      %v329 = vrot.slane %v327, 1
      %v330 = vsel %vm310, %v325, %v329
      %v331 = vshrl.u32 %v295, 16
      %v333 = vor.u32 %v331, %v329
      %v335 = vshll.u32 %v296, 16
      %v337 = vrot.slane %v335, 1
      %v338 = vsel %vm310, %v333, %v337
      %v339 = vshrl.u32 %v296, 16
      %v341 = vor.u32 %v339, %v337
      %v343 = vshll.u32 %v297, 16
      %v345 = vrot.slane %v343, 1
      %v346 = vsel %vm310, %v341, %v345
      %v347 = vshrl.u32 %v297, 16
      %v349 = vor.u32 %v347, %v345
      %v351 = vshll.u32 %v298, 16
      %v353 = vrot.slane %v351, 1
      %v354 = vsel %vm310, %v349, %v353
      %v355 = vshrl.u32 %v298, 16
      %v357 = vor.u32 %v355, %v353
      %v359 = vshll.u32 %v299, 16
      %v361 = vrot.slane %v359, 1
      %v362 = vsel %vm310, %v357, %v361
      %v363 = vshrl.u32 %v299, 16
      %v365 = vor.u32 %v363, %v361
      %v367 = vshll.u32 %v300, 16
      %v369 = vrot.slane %v367, 1
      %v370 = vsel %vm310, %v365, %v369
      %v371 = vshrl.u32 %v300, 16
      %v373 = vor.u32 %v371, %v369
      %v375 = vshll.u32 %v301, 16
      %v377 = vrot.slane %v375, 1
      %v378 = vsel %vm310, %v373, %v377
      %v379 = vshrl.u32 %v301, 16
      %v381 = vor.u32 %v379, %v377
      %v383 = vshll.u32 %v302, 16
      %v385 = vrot.slane %v383, 1
      %v386 = vsel %vm310, %v381, %v385
      %v387 = vshrl.u32 %v302, 16
      %v389 = vor.u32 %v387, %v385
      %v391 = vshll.u32 %v303, 16
      %v393 = vrot.slane %v391, 1
      %v394 = vsel %vm310, %v389, %v393
      %v395 = vshrl.u32 %v303, 16
      %v397 = vor.u32 %v395, %v393
      %v399 = vshll.u32 %v304, 16
      %v401 = vrot.slane %v399, 1
      %v402 = vsel %vm310, %v397, %v401
      %v403 = vshrl.u32 %v304, 16
      %v405 = vor.u32 %v403, %v401
      %v407 = vshll.u32 %v305, 16
      %v409 = vrot.slane %v407, 1
      %v410 = vsel %vm310, %v405, %v409
      %v411 = vshrl.u32 %v305, 16
      %v413 = vor.u32 %v411, %v409
      %v415 = vshll.u32 %v306, 16
      %v417 = vrot.slane %v415, 1
      %v418 = vsel %vm310, %v413, %v417
      %v419 = vshrl.u32 %v306, 16
      %v421 = vor.u32 %v419, %v417
      %v423 = vshll.u32 %v309, 16
      %v425 = vrot.slane %v423, 1
      %v426 = vsel %vm310, %v421, %v425
      %427 = vrot.lane.b32.xlu0 %v322, 4
      %v428 = vpop.permute.xlu0 %427
      %429 = vrot.lane.b32.xlu0 %v330, 4
      %v430 = vpop.permute.xlu0 %429
      %431 = vrot.lane.b32.xlu0 %v338, 4
      %v432 = vpop.permute.xlu0 %431
      %433 = vrot.lane.b32.xlu0 %v346, 4
      %v434 = vpop.permute.xlu0 %433
      %435 = vrot.lane.b32.xlu0 %v354, 4
      %v436 = vpop.permute.xlu0 %435
      %437 = vrot.lane.b32.xlu0 %v362, 4
      %v438 = vpop.permute.xlu0 %437
      %439 = vrot.lane.b32.xlu0 %v370, 4
      %v440 = vpop.permute.xlu0 %439
      %441 = vrot.lane.b32.xlu0 %v378, 4
      %v442 = vpop.permute.xlu0 %441
      %443 = vrot.lane.b32.xlu0 %v386, 4
      %v444 = vpop.permute.xlu0 %443
      %445 = vrot.lane.b32.xlu0 %v394, 4
      %v446 = vpop.permute.xlu0 %445
      %447 = vrot.lane.b32.xlu0 %v402, 4
      %v448 = vpop.permute.xlu0 %447
      %449 = vrot.lane.b32.xlu0 %v410, 4
      %v450 = vpop.permute.xlu0 %449
      %451 = vrot.lane.b32.xlu0 %v418, 4
      %v452 = vpop.permute.xlu0 %451
      %453 = vrot.lane.b32.xlu0 %v426, 4
      %v454 = vpop.permute.xlu0 %453
      %v456 = vunpack.c.l.b16 %v228
      %v457 = vpack.c.b16 %v266, %v456
      %vm458 = vcmask 1046528
      %v459 = vrot.slane %v457, 1
      %v460 = vrot.slane %v294, 1
      %v461 = vsel %vm458, %v459, %v460
      %v462 = vrot.slane %v295, 1
      %v463 = vsel %vm458, %v460, %v462
      %v464 = vrot.slane %v296, 1
      %v465 = vsel %vm458, %v462, %v464
      %v466 = vrot.slane %v297, 1
      %v467 = vsel %vm458, %v464, %v466
      %v468 = vrot.slane %v298, 1
      %v469 = vsel %vm458, %v466, %v468
      %v470 = vrot.slane %v299, 1
      %v471 = vsel %vm458, %v468, %v470
      %v472 = vrot.slane %v300, 1
      %v473 = vsel %vm458, %v470, %v472
      %v474 = vrot.slane %v301, 1
      %v475 = vsel %vm458, %v472, %v474
      %v476 = vrot.slane %v302, 1
      %v477 = vsel %vm458, %v474, %v476
      %v478 = vrot.slane %v303, 1
      %v479 = vsel %vm458, %v476, %v478
      %v480 = vrot.slane %v304, 1
      %v481 = vsel %vm458, %v478, %v480
      %v482 = vrot.slane %v305, 1
      %v483 = vsel %vm458, %v480, %v482
      %v484 = vrot.slane %v306, 1
      %v485 = vsel %vm458, %v482, %v484
      %v486 = vrot.slane %v309, 1
      %v487 = vsel %vm458, %v484, %v486
      %488 = vrot.lane.b32.xlu0 %v461, 8
      %v489 = vpop.permute.xlu0 %488
      %490 = vrot.lane.b32.xlu0 %v463, 8
      %v491 = vpop.permute.xlu0 %490
      %492 = vrot.lane.b32.xlu0 %v465, 8
      %v493 = vpop.permute.xlu0 %492
      %494 = vrot.lane.b32.xlu0 %v467, 8
      %v495 = vpop.permute.xlu0 %494
      %496 = vrot.lane.b32.xlu0 %v469, 8
      %v497 = vpop.permute.xlu0 %496
      %498 = vrot.lane.b32.xlu0 %v471, 8
      %v499 = vpop.permute.xlu0 %498
      %500 = vrot.lane.b32.xlu0 %v473, 8
      %v501 = vpop.permute.xlu0 %500
      %502 = vrot.lane.b32.xlu0 %v475, 8
      %v503 = vpop.permute.xlu0 %502
      %504 = vrot.lane.b32.xlu0 %v477, 8
      %v505 = vpop.permute.xlu0 %504
      %506 = vrot.lane.b32.xlu0 %v479, 8
      %v507 = vpop.permute.xlu0 %506
      %508 = vrot.lane.b32.xlu0 %v481, 8
      %v509 = vpop.permute.xlu0 %508
      %510 = vrot.lane.b32.xlu0 %v483, 8
      %v511 = vpop.permute.xlu0 %510
      %512 = vrot.lane.b32.xlu0 %v485, 8
      %v513 = vpop.permute.xlu0 %512
      %514 = vrot.lane.b32.xlu0 %v487, 8
      %v515 = vpop.permute.xlu0 %514
      %v518 = vunpack.c.l.b16 %v229
      %v519 = vunpack.c.l.b16 %v230
      %v520 = vpack.c.b16 %v519, %v518
      %521 = vrot.lane.b32.xlu0 %v294, 12
      %v522 = vpop.permute.xlu0 %521
      %523 = vrot.lane.b32.xlu0 %v295, 12
      %v524 = vpop.permute.xlu0 %523
      %525 = vrot.lane.b32.xlu0 %v296, 12
      %v526 = vpop.permute.xlu0 %525
      %527 = vrot.lane.b32.xlu0 %v297, 12
      %v528 = vpop.permute.xlu0 %527
      %529 = vrot.lane.b32.xlu0 %v298, 12
      %v530 = vpop.permute.xlu0 %529
      %531 = vrot.lane.b32.xlu0 %v299, 12
      %v532 = vpop.permute.xlu0 %531
      %533 = vrot.lane.b32.xlu0 %v300, 12
      %v534 = vpop.permute.xlu0 %533
      %535 = vrot.lane.b32.xlu0 %v301, 12
      %v536 = vpop.permute.xlu0 %535
      %537 = vrot.lane.b32.xlu0 %v302, 12
      %v538 = vpop.permute.xlu0 %537
      %539 = vrot.lane.b32.xlu0 %v303, 12
      %v540 = vpop.permute.xlu0 %539
      %541 = vrot.lane.b32.xlu0 %v304, 12
      %v542 = vpop.permute.xlu0 %541
      %543 = vrot.lane.b32.xlu0 %v305, 12
      %v544 = vpop.permute.xlu0 %543
      %545 = vrot.lane.b32.xlu0 %v306, 12
      %v546 = vpop.permute.xlu0 %545
      %547 = vrot.lane.b32.xlu0 %v520, 12
      %v548 = vpop.permute.xlu0 %547
      %v550 = vunpack.c.l.b16 %v231
      %v551 = vpack.c.b16 %v550, %v550
      %v553 = vshll.u32 %v520, 16
      %v555 = vrot.slane %v553, 1
      %v556 = vsel %vm310, %v421, %v555
      %v557 = vshrl.u32 %v520, 16
      %v559 = vor.u32 %v557, %v555
      %v561 = vshll.u32 %v551, 16
      %v563 = vrot.slane %v561, 1
      %v564 = vsel %vm310, %v559, %v563
      %565 = vrot.lane.b32.xlu0 %v330, 16
      %v566 = vpop.permute.xlu0 %565
      %567 = vrot.lane.b32.xlu0 %v338, 16
      %v568 = vpop.permute.xlu0 %567
      %569 = vrot.lane.b32.xlu0 %v346, 16
      %v570 = vpop.permute.xlu0 %569
      %571 = vrot.lane.b32.xlu0 %v354, 16
      %v572 = vpop.permute.xlu0 %571
      %573 = vrot.lane.b32.xlu0 %v362, 16
      %v574 = vpop.permute.xlu0 %573
      %575 = vrot.lane.b32.xlu0 %v370, 16
      %v576 = vpop.permute.xlu0 %575
      %577 = vrot.lane.b32.xlu0 %v378, 16
      %v578 = vpop.permute.xlu0 %577
      %579 = vrot.lane.b32.xlu0 %v386, 16
      %v580 = vpop.permute.xlu0 %579
      %581 = vrot.lane.b32.xlu0 %v394, 16
      %v582 = vpop.permute.xlu0 %581
      %583 = vrot.lane.b32.xlu0 %v402, 16
      %v584 = vpop.permute.xlu0 %583
      %585 = vrot.lane.b32.xlu0 %v410, 16
      %v586 = vpop.permute.xlu0 %585
      %587 = vrot.lane.b32.xlu0 %v418, 16
      %v588 = vpop.permute.xlu0 %587
      %589 = vrot.lane.b32.xlu0 %v556, 16
      %v590 = vpop.permute.xlu0 %589
      %591 = vrot.lane.b32.xlu0 %v564, 16
      %v592 = vpop.permute.xlu0 %591
      %v594 = vunpack.c.l.b16 %v232
      %v595 = vpack.c.b16 %v268, %v594
      %v596 = vrot.slane %v595, 1
      %v597 = vsel %vm458, %v596, %v462
      %v598 = vrot.slane %v520, 1
      %v599 = vsel %vm458, %v484, %v598
      %v600 = vrot.slane %v551, 1
      %v601 = vsel %vm458, %v598, %v600
      %602 = vrot.lane.b32.xlu0 %v597, 20
      %v603 = vpop.permute.xlu0 %602
      %604 = vrot.lane.b32.xlu0 %v465, 20
      %v605 = vpop.permute.xlu0 %604
      %606 = vrot.lane.b32.xlu0 %v467, 20
      %v607 = vpop.permute.xlu0 %606
      %608 = vrot.lane.b32.xlu0 %v469, 20
      %v609 = vpop.permute.xlu0 %608
      %610 = vrot.lane.b32.xlu0 %v471, 20
      %v611 = vpop.permute.xlu0 %610
      %612 = vrot.lane.b32.xlu0 %v473, 20
      %v613 = vpop.permute.xlu0 %612
      %614 = vrot.lane.b32.xlu0 %v475, 20
      %v615 = vpop.permute.xlu0 %614
      %616 = vrot.lane.b32.xlu0 %v477, 20
      %v617 = vpop.permute.xlu0 %616
      %618 = vrot.lane.b32.xlu0 %v479, 20
      %v619 = vpop.permute.xlu0 %618
      %620 = vrot.lane.b32.xlu0 %v481, 20
      %v621 = vpop.permute.xlu0 %620
      %622 = vrot.lane.b32.xlu0 %v483, 20
      %v623 = vpop.permute.xlu0 %622
      %624 = vrot.lane.b32.xlu0 %v485, 20
      %v625 = vpop.permute.xlu0 %624
      %626 = vrot.lane.b32.xlu0 %v599, 20
      %v627 = vpop.permute.xlu0 %626
      %628 = vrot.lane.b32.xlu0 %v601, 20
      %v629 = vpop.permute.xlu0 %628
      %v632 = vunpack.c.l.b16 %v233
      %v633 = vunpack.c.l.b16 %v234
      %v634 = vpack.c.b16 %v633, %v632
      %635 = vrot.lane.b32.xlu0 %v295, 24
      %v636 = vpop.permute.xlu0 %635
      %637 = vrot.lane.b32.xlu0 %v296, 24
      %v638 = vpop.permute.xlu0 %637
      %639 = vrot.lane.b32.xlu0 %v297, 24
      %v640 = vpop.permute.xlu0 %639
      %641 = vrot.lane.b32.xlu0 %v298, 24
      %v642 = vpop.permute.xlu0 %641
      %643 = vrot.lane.b32.xlu0 %v299, 24
      %v644 = vpop.permute.xlu0 %643
      %645 = vrot.lane.b32.xlu0 %v300, 24
      %v646 = vpop.permute.xlu0 %645
      %647 = vrot.lane.b32.xlu0 %v301, 24
      %v648 = vpop.permute.xlu0 %647
      %649 = vrot.lane.b32.xlu0 %v302, 24
      %v650 = vpop.permute.xlu0 %649
      %651 = vrot.lane.b32.xlu0 %v303, 24
      %v652 = vpop.permute.xlu0 %651
      %653 = vrot.lane.b32.xlu0 %v304, 24
      %v654 = vpop.permute.xlu0 %653
      %655 = vrot.lane.b32.xlu0 %v305, 24
      %v656 = vpop.permute.xlu0 %655
      %657 = vrot.lane.b32.xlu0 %v306, 24
      %v658 = vpop.permute.xlu0 %657
      %659 = vrot.lane.b32.xlu0 %v520, 24
      %v660 = vpop.permute.xlu0 %659
      %661 = vrot.lane.b32.xlu0 %v634, 24
      %v662 = vpop.permute.xlu0 %661
      %v664 = vunpack.c.l.b16 %v235
      %v665 = vpack.c.b16 %v664, %v664
      %v667 = vshll.u32 %v634, 16
      %v669 = vrot.slane %v667, 1
      %v670 = vsel %vm310, %v559, %v669
      %v671 = vshrl.u32 %v634, 16
      %v673 = vor.u32 %v671, %v669
      %v675 = vshll.u32 %v665, 16
      %v677 = vrot.slane %v675, 1
      %v678 = vsel %vm310, %v673, %v677
      %679 = vrot.lane.b32.xlu0 %v338, 28
      %v680 = vpop.permute.xlu0 %679
      %681 = vrot.lane.b32.xlu0 %v346, 28
      %v682 = vpop.permute.xlu0 %681
      %683 = vrot.lane.b32.xlu0 %v354, 28
      %v684 = vpop.permute.xlu0 %683
      %685 = vrot.lane.b32.xlu0 %v362, 28
      %v686 = vpop.permute.xlu0 %685
      %687 = vrot.lane.b32.xlu0 %v370, 28
      %v688 = vpop.permute.xlu0 %687
      %689 = vrot.lane.b32.xlu0 %v378, 28
      %v690 = vpop.permute.xlu0 %689
      %691 = vrot.lane.b32.xlu0 %v386, 28
      %v692 = vpop.permute.xlu0 %691
      %693 = vrot.lane.b32.xlu0 %v394, 28
      %v694 = vpop.permute.xlu0 %693
      %695 = vrot.lane.b32.xlu0 %v402, 28
      %v696 = vpop.permute.xlu0 %695
      %697 = vrot.lane.b32.xlu0 %v410, 28
      %v698 = vpop.permute.xlu0 %697
      %699 = vrot.lane.b32.xlu0 %v418, 28
      %v700 = vpop.permute.xlu0 %699
      %701 = vrot.lane.b32.xlu0 %v556, 28
      %v702 = vpop.permute.xlu0 %701
      %703 = vrot.lane.b32.xlu0 %v670, 28
      %v704 = vpop.permute.xlu0 %703
      %705 = vrot.lane.b32.xlu0 %v678, 28
      %v706 = vpop.permute.xlu0 %705
      %v708 = vunpack.c.l.b16 %v236
      %v709 = vpack.c.b16 %v270, %v708
      %v710 = vrot.slane %v709, 1
      %v711 = vsel %vm458, %v710, %v464
      %v712 = vrot.slane %v634, 1
      %v713 = vsel %vm458, %v598, %v712
      %v714 = vrot.slane %v665, 1
      %v715 = vsel %vm458, %v712, %v714
      %716 = vrot.lane.b32.xlu0 %v711, 32
      %v717 = vpop.permute.xlu0 %716
      %718 = vrot.lane.b32.xlu0 %v467, 32
      %v719 = vpop.permute.xlu0 %718
      %720 = vrot.lane.b32.xlu0 %v469, 32
      %v721 = vpop.permute.xlu0 %720
      %722 = vrot.lane.b32.xlu0 %v471, 32
      %v723 = vpop.permute.xlu0 %722
      %724 = vrot.lane.b32.xlu0 %v473, 32
      %v725 = vpop.permute.xlu0 %724
      %726 = vrot.lane.b32.xlu0 %v475, 32
      %v727 = vpop.permute.xlu0 %726
      %728 = vrot.lane.b32.xlu0 %v477, 32
      %v729 = vpop.permute.xlu0 %728
      %730 = vrot.lane.b32.xlu0 %v479, 32
      %v731 = vpop.permute.xlu0 %730
      %732 = vrot.lane.b32.xlu0 %v481, 32
      %v733 = vpop.permute.xlu0 %732
      %734 = vrot.lane.b32.xlu0 %v483, 32
      %v735 = vpop.permute.xlu0 %734
      %736 = vrot.lane.b32.xlu0 %v485, 32
      %v737 = vpop.permute.xlu0 %736
      %738 = vrot.lane.b32.xlu0 %v599, 32
      %v739 = vpop.permute.xlu0 %738
      %740 = vrot.lane.b32.xlu0 %v713, 32
      %v741 = vpop.permute.xlu0 %740
      %742 = vrot.lane.b32.xlu0 %v715, 32
      %v743 = vpop.permute.xlu0 %742
      %vm744 = vcmask 31744
      %v746 = vsel %vm744, %v293, %v428
      %v748 = vsel %vm744, %v294, %v430
      %v750 = vsel %vm744, %v295, %v432
      %v752 = vsel %vm744, %v296, %v434
      %v754 = vsel %vm744, %v297, %v436
      %v756 = vsel %vm744, %v298, %v438
      %v758 = vsel %vm744, %v299, %v440
      %v760 = vsel %vm744, %v300, %v442
      %v762 = vsel %vm744, %v301, %v444
      %v764 = vsel %vm744, %v302, %v446
      %v766 = vsel %vm744, %v303, %v448
      %v768 = vsel %vm744, %v304, %v450
      %v770 = vsel %vm744, %v305, %v452
      %v772 = vsel %vm744, %v306, %v454
      %vm773 = vcmask 64512
      %v775 = vsel %vm773, %v746, %v489
      %v777 = vsel %vm773, %v748, %v491
      %v779 = vsel %vm773, %v750, %v493
      %v781 = vsel %vm773, %v752, %v495
      %v783 = vsel %vm773, %v754, %v497
      %v785 = vsel %vm773, %v756, %v499
      %v787 = vsel %vm773, %v758, %v501
      %v789 = vsel %vm773, %v760, %v503
      %v791 = vsel %vm773, %v762, %v505
      %v793 = vsel %vm773, %v764, %v507
      %v795 = vsel %vm773, %v766, %v509
      %v797 = vsel %vm773, %v768, %v511
      %v799 = vsel %vm773, %v770, %v513
      %v801 = vsel %vm773, %v772, %v515
      %vm802 = vcmask 97280
      %v804 = vsel %vm802, %v775, %v522
      %v806 = vsel %vm802, %v777, %v524
      %v808 = vsel %vm802, %v779, %v526
      %v810 = vsel %vm802, %v781, %v528
      %v812 = vsel %vm802, %v783, %v530
      %v814 = vsel %vm802, %v785, %v532
      %v816 = vsel %vm802, %v787, %v534
      %v818 = vsel %vm802, %v789, %v536
      %v820 = vsel %vm802, %v791, %v538
      %v822 = vsel %vm802, %v793, %v540
      %v824 = vsel %vm802, %v795, %v542
      %v826 = vsel %vm802, %v797, %v544
      %v828 = vsel %vm802, %v799, %v546
      %v830 = vsel %vm802, %v801, %v548
      %vm831 = vcmask 130048
      %v833 = vsel %vm831, %v804, %v566
      %v835 = vsel %vm831, %v806, %v568
      %v837 = vsel %vm831, %v808, %v570
      %v839 = vsel %vm831, %v810, %v572
      %v841 = vsel %vm831, %v812, %v574
      %v843 = vsel %vm831, %v814, %v576
      %v845 = vsel %vm831, %v816, %v578
      %v847 = vsel %vm831, %v818, %v580
      %v849 = vsel %vm831, %v820, %v582
      %v851 = vsel %vm831, %v822, %v584
      %v853 = vsel %vm831, %v824, %v586
      %v855 = vsel %vm831, %v826, %v588
      %v857 = vsel %vm831, %v828, %v590
      %v859 = vsel %vm831, %v830, %v592
      %vm860 = vcmask 162816
      %v862 = vsel %vm860, %v833, %v603
      %v864 = vsel %vm860, %v835, %v605
      %v866 = vsel %vm860, %v837, %v607
      %v868 = vsel %vm860, %v839, %v609
      %v870 = vsel %vm860, %v841, %v611
      %v872 = vsel %vm860, %v843, %v613
      %v874 = vsel %vm860, %v845, %v615
      %v876 = vsel %vm860, %v847, %v617
      %v878 = vsel %vm860, %v849, %v619
      %v880 = vsel %vm860, %v851, %v621
      %v882 = vsel %vm860, %v853, %v623
      %v884 = vsel %vm860, %v855, %v625
      %v886 = vsel %vm860, %v857, %v627
      %v888 = vsel %vm860, %v859, %v629
      %vm889 = vcmask 195584
      %v891 = vsel %vm889, %v862, %v636
      %v893 = vsel %vm889, %v864, %v638
      %v895 = vsel %vm889, %v866, %v640
      %v897 = vsel %vm889, %v868, %v642
      %v899 = vsel %vm889, %v870, %v644
      %v901 = vsel %vm889, %v872, %v646
      %v903 = vsel %vm889, %v874, %v648
      %v905 = vsel %vm889, %v876, %v650
      %v907 = vsel %vm889, %v878, %v652
      %v909 = vsel %vm889, %v880, %v654
      %v911 = vsel %vm889, %v882, %v656
      %v913 = vsel %vm889, %v884, %v658
      %v915 = vsel %vm889, %v886, %v660
      %v917 = vsel %vm889, %v888, %v662
      %vm918 = vcmask 228352
      %v920 = vsel %vm918, %v891, %v680
      %v922 = vsel %vm918, %v893, %v682
      %v924 = vsel %vm918, %v895, %v684
      %v926 = vsel %vm918, %v897, %v686
      %v928 = vsel %vm918, %v899, %v688
      %v930 = vsel %vm918, %v901, %v690
      %v932 = vsel %vm918, %v903, %v692
      %v934 = vsel %vm918, %v905, %v694
      %v936 = vsel %vm918, %v907, %v696
      %v938 = vsel %vm918, %v909, %v698
      %v940 = vsel %vm918, %v911, %v700
      %v942 = vsel %vm918, %v913, %v702
      %v944 = vsel %vm918, %v915, %v704
      %v946 = vsel %vm918, %v917, %v706
      %vm947 = vcmask 261120
      %v949 = vsel %vm947, %v920, %v717
      %v951 = vsel %vm947, %v922, %v719
      %v953 = vsel %vm947, %v924, %v721
      %v955 = vsel %vm947, %v926, %v723
      %v957 = vsel %vm947, %v928, %v725
      %v959 = vsel %vm947, %v930, %v727
      %v961 = vsel %vm947, %v932, %v729
      %v963 = vsel %vm947, %v934, %v731
      %v965 = vsel %vm947, %v936, %v733
      %v967 = vsel %vm947, %v938, %v735
      %v969 = vsel %vm947, %v940, %v737
      %v971 = vsel %vm947, %v942, %v739
      %v973 = vsel %vm947, %v944, %v741
      %v975 = vsel %vm947, %v946, %v743
      %v976 = vld [vmem:[%s1] sm:$0xf]
      %v977 = vld [vmem:[%s1 + $0x4] sm:$0xf]
      %v978 = vld [vmem:[%s1 + $0x8] sm:$0xf]
      %v979 = vld [vmem:[%s1 + $0xc] sm:$0xf]
      %v980 = vld [vmem:[%s1 + $0x10] sm:$0x3]
      %v986 = vunpack.c.l.b16 %v976
      %v987 = vunpack.c.l.b16 %v977
      %v988 = vunpack.c.l.b16 %v978
      %v989 = vunpack.c.l.b16 %v979
      %v990 = vunpack.c.l.b16 %v980
      %v991 = vpack.c.b16 %v987, %v986
      %v992 = vpack.c.b16 %v989, %v988
      %v993 = vpack.c.b16 %v990, %v990
      %vm996 = vcmask 293888
      %v997 = vsel %vm996, %v949, 0
      %v999 = vsel %vm996, %v951, 0
      %v1001 = vsel %vm996, %v953, 0
      %v1003 = vsel %vm996, %v955, 0
      %v1005 = vsel %vm996, %v957, 0
      %v1007 = vsel %vm996, %v959, 0
      %v1009 = vsel %vm996, %v961, 0
      %v1011 = vsel %vm996, %v963, 0
      %v1013 = vsel %vm996, %v965, 0
      %v1015 = vsel %vm996, %v967, 0
      %v1017 = vsel %vm996, %v969, 0
      %v1019 = vsel %vm996, %v971, 0
      %v1021 = vsel %vm996, %v973, 0
      %v1023 = vsel %vm996, %v975, 0
      %vm1025 = vcmask 1041408
      %v1027 = vsel %vm1025, %v993, 0
      %1029 = vmatpush.bf16.msra.mxu0 0
      %1030 = vmatpush.bf16.msra.mxu0 0
      %1031 = vmatpush.bf16.msra.mxu0 0
      %1032 = vmatpush.bf16.msra.mxu0 0
      %1033 = vmatpush.bf16.msra.mxu0 0
      %1034 = vmatpush.bf16.msra.mxu0 %v1027
      %1035 = vmatpush.bf16.msra.mxu0 %v992
      %1036 = vmatpush.bf16.msra.mxu0 %v991
      %1037 = vmatmul.bf16.gmra.mxu0 %v997
      %v1038 = vpop.f32.mrf.mxu0
      %v1039 = vadd.f32 0.0, %v1038
      %v1040 = vpop.f32.mrf.mxu0
      %v1041 = vadd.f32 0.0, %v1040
      %1042 = vmatmul.bf16.gmra.mxu0 %v999
      %v1043 = vpop.f32.mrf.mxu0
      %v1044 = vadd.f32 0.0, %v1043
      %v1045 = vpop.f32.mrf.mxu0
      %v1046 = vadd.f32 0.0, %v1045
      %1047 = vmatmul.bf16.gmra.mxu0 %v1001
      %v1048 = vpop.f32.mrf.mxu0
      %v1049 = vadd.f32 0.0, %v1048
      %v1050 = vpop.f32.mrf.mxu0
      %v1051 = vadd.f32 0.0, %v1050
      %1052 = vmatmul.bf16.gmra.mxu0 %v1003
      %v1053 = vpop.f32.mrf.mxu0
      %v1054 = vadd.f32 0.0, %v1053
      %v1055 = vpop.f32.mrf.mxu0
      %v1056 = vadd.f32 0.0, %v1055
      %1057 = vmatmul.bf16.gmra.mxu0 %v1005
      %v1058 = vpop.f32.mrf.mxu0
      %v1059 = vadd.f32 0.0, %v1058
      %v1060 = vpop.f32.mrf.mxu0
      %v1061 = vadd.f32 0.0, %v1060
      %1062 = vmatmul.bf16.gmra.mxu0 %v1007
      %v1063 = vpop.f32.mrf.mxu0
      %v1064 = vadd.f32 0.0, %v1063
      %v1065 = vpop.f32.mrf.mxu0
      %v1066 = vadd.f32 0.0, %v1065
      %1067 = vmatmul.bf16.gmra.mxu0 %v1009
      %v1068 = vpop.f32.mrf.mxu0
      %v1069 = vadd.f32 0.0, %v1068
      %v1070 = vpop.f32.mrf.mxu0
      %v1071 = vadd.f32 0.0, %v1070
      %1072 = vmatmul.bf16.gmra.mxu0 %v1011
      %v1073 = vpop.f32.mrf.mxu0
      %v1074 = vadd.f32 0.0, %v1073
      %v1075 = vpop.f32.mrf.mxu0
      %v1076 = vadd.f32 0.0, %v1075
      %1077 = vmatmul.bf16.gmra.mxu0 %v1013
      %v1078 = vpop.f32.mrf.mxu0
      %v1079 = vadd.f32 0.0, %v1078
      %v1080 = vpop.f32.mrf.mxu0
      %v1081 = vadd.f32 0.0, %v1080
      %1082 = vmatmul.bf16.gmra.mxu0 %v1015
      %v1083 = vpop.f32.mrf.mxu0
      %v1084 = vadd.f32 0.0, %v1083
      %v1085 = vpop.f32.mrf.mxu0
      %v1086 = vadd.f32 0.0, %v1085
      %1087 = vmatmul.bf16.gmra.mxu0 %v1017
      %v1088 = vpop.f32.mrf.mxu0
      %v1089 = vadd.f32 0.0, %v1088
      %v1090 = vpop.f32.mrf.mxu0
      %v1091 = vadd.f32 0.0, %v1090
      %1092 = vmatmul.bf16.gmra.mxu0 %v1019
      %v1093 = vpop.f32.mrf.mxu0
      %v1094 = vadd.f32 0.0, %v1093
      %v1095 = vpop.f32.mrf.mxu0
      %v1096 = vadd.f32 0.0, %v1095
      %1097 = vmatmul.bf16.gmra.mxu0 %v1021
      %v1098 = vpop.f32.mrf.mxu0
      %v1099 = vadd.f32 0.0, %v1098
      %v1100 = vpop.f32.mrf.mxu0
      %v1101 = vadd.f32 0.0, %v1100
      %1102 = vmatmul.bf16.gmra.mxu0 %v1023
      %v1103 = vpop.f32.mrf.mxu0
      %v1104 = vadd.f32 0.0, %v1103
      %v1105 = vpop.f32.mrf.mxu0
      %v1106 = vadd.f32 0.0, %v1105
      %1107 = vdwg.mxu0
      %v1108 = vlaneseq
      %v1109 = vshrl.u32 %v1108, 7
      %v1110 = vadd.s32 %v1109, 8
      %v1111 = vadd.s32 %v1109, 16
      %v1112 = vadd.s32 %v1109, 24
      %v1113 = vadd.s32 %v1109, 32
      %v1114 = vadd.s32 %v1109, 40
      %v1115 = vadd.s32 %v1109, 48
      %v1116 = vadd.s32 %v1109, 56
      %v1117 = vadd.s32 %v1109, 64
      %v1118 = vadd.s32 %v1109, 72
      %v1119 = vadd.s32 %v1109, 80
      %v1120 = vadd.s32 %v1109, 88
      %v1121 = vadd.s32 %v1109, 96
      %v1122 = vadd.s32 %v1109, 104
      %v1123 = vadd.s32 %v1109, 112
      %v1124 = vadd.s32 %v1109, 120
      %v1125 = vadd.s32 %v1109, 128
      %v1126 = vadd.s32 %v1109, 136
      %v1127 = vadd.s32 %v1109, 144
      %v1128 = vadd.s32 %v1109, 152
      %v1129 = vadd.s32 %v1109, 160
      %v1130 = vadd.s32 %v1109, 168
      %v1131 = vadd.s32 %v1109, 176
      %v1132 = vadd.s32 %v1109, 184
      %v1133 = vadd.s32 %v1109, 192
      %v1134 = vadd.s32 %v1109, 200
      %v1135 = vadd.s32 %v1109, 208
      %v1136 = vadd.s32 %v1109, 216
      %vm1137 = vcmp.lt.s32.totalorder %v1109, 0
      %v1138 = vsub.s32 0, %v1109
      %v1139 = vsel %vm1137, %v1138, %v1109
      %v1140 = vshrl.u32 %v1139, 4
      %v1141 = vand.u32 %v1139, 15
      %v1142 = vsub.s32 0, %v1141
      %v1143 = vsel %vm1137, %v1142, %v1141
      %vm1144 = vcmp.lt.s32.totalorder %v1110, 0
      %v1145 = vsub.s32 0, %v1110
      %v1146 = vsel %vm1144, %v1145, %v1110
      %v1147 = vshrl.u32 %v1146, 4
      %v1148 = vand.u32 %v1146, 15
      %v1149 = vsub.s32 0, %v1148
      %v1150 = vsel %vm1144, %v1149, %v1148
      %vm1151 = vcmp.lt.s32.totalorder %v1111, 0
      %v1152 = vsub.s32 0, %v1111
      %v1153 = vsel %vm1151, %v1152, %v1111
      %v1154 = vshrl.u32 %v1153, 4
      %v1155 = vand.u32 %v1153, 15
      %v1156 = vsub.s32 0, %v1155
      %v1157 = vsel %vm1151, %v1156, %v1155
      %vm1158 = vcmp.lt.s32.totalorder %v1112, 0
      %v1159 = vsub.s32 0, %v1112
      %v1160 = vsel %vm1158, %v1159, %v1112
      %v1161 = vshrl.u32 %v1160, 4
      %v1162 = vand.u32 %v1160, 15
      %v1163 = vsub.s32 0, %v1162
      %v1164 = vsel %vm1158, %v1163, %v1162
      %vm1165 = vcmp.lt.s32.totalorder %v1113, 0
      %v1166 = vsub.s32 0, %v1113
      %v1167 = vsel %vm1165, %v1166, %v1113
      %v1168 = vshrl.u32 %v1167, 4
      %v1169 = vand.u32 %v1167, 15
      %v1170 = vsub.s32 0, %v1169
      %v1171 = vsel %vm1165, %v1170, %v1169
      %vm1172 = vcmp.lt.s32.totalorder %v1114, 0
      %v1173 = vsub.s32 0, %v1114
      %v1174 = vsel %vm1172, %v1173, %v1114
      %v1175 = vshrl.u32 %v1174, 4
      %v1176 = vand.u32 %v1174, 15
      %v1177 = vsub.s32 0, %v1176
      %v1178 = vsel %vm1172, %v1177, %v1176
      %vm1179 = vcmp.lt.s32.totalorder %v1115, 0
      %v1180 = vsub.s32 0, %v1115
      %v1181 = vsel %vm1179, %v1180, %v1115
      %v1182 = vshrl.u32 %v1181, 4
      %v1183 = vand.u32 %v1181, 15
      %v1184 = vsub.s32 0, %v1183
      %v1185 = vsel %vm1179, %v1184, %v1183
      %vm1186 = vcmp.lt.s32.totalorder %v1116, 0
      %v1187 = vsub.s32 0, %v1116
      %v1188 = vsel %vm1186, %v1187, %v1116
      %v1189 = vshrl.u32 %v1188, 4
      %v1190 = vand.u32 %v1188, 15
      %v1191 = vsub.s32 0, %v1190
      %v1192 = vsel %vm1186, %v1191, %v1190
      %vm1193 = vcmp.lt.s32.totalorder %v1117, 0
      %v1194 = vsub.s32 0, %v1117
      %v1195 = vsel %vm1193, %v1194, %v1117
      %v1196 = vshrl.u32 %v1195, 4
      %v1197 = vand.u32 %v1195, 15
      %v1198 = vsub.s32 0, %v1197
      %v1199 = vsel %vm1193, %v1198, %v1197
      %vm1200 = vcmp.lt.s32.totalorder %v1118, 0
      %v1201 = vsub.s32 0, %v1118
      %v1202 = vsel %vm1200, %v1201, %v1118
      %v1203 = vshrl.u32 %v1202, 4
      %v1204 = vand.u32 %v1202, 15
      %v1205 = vsub.s32 0, %v1204
      %v1206 = vsel %vm1200, %v1205, %v1204
      %vm1207 = vcmp.lt.s32.totalorder %v1119, 0
      %v1208 = vsub.s32 0, %v1119
      %v1209 = vsel %vm1207, %v1208, %v1119
      %v1210 = vshrl.u32 %v1209, 4
      %v1211 = vand.u32 %v1209, 15
      %v1212 = vsub.s32 0, %v1211
      %v1213 = vsel %vm1207, %v1212, %v1211
      %vm1214 = vcmp.lt.s32.totalorder %v1120, 0
      %v1215 = vsub.s32 0, %v1120
      %v1216 = vsel %vm1214, %v1215, %v1120
      %v1217 = vshrl.u32 %v1216, 4
      %v1218 = vand.u32 %v1216, 15
      %v1219 = vsub.s32 0, %v1218
      %v1220 = vsel %vm1214, %v1219, %v1218
      %vm1221 = vcmp.lt.s32.totalorder %v1121, 0
      %v1222 = vsub.s32 0, %v1121
      %v1223 = vsel %vm1221, %v1222, %v1121
      %v1224 = vshrl.u32 %v1223, 4
      %v1225 = vand.u32 %v1223, 15
      %v1226 = vsub.s32 0, %v1225
      %v1227 = vsel %vm1221, %v1226, %v1225
      %vm1228 = vcmp.lt.s32.totalorder %v1122, 0
      %v1229 = vsub.s32 0, %v1122
      %v1230 = vsel %vm1228, %v1229, %v1122
      %v1231 = vshrl.u32 %v1230, 4
      %v1232 = vand.u32 %v1230, 15
      %v1233 = vsub.s32 0, %v1232
      %v1234 = vsel %vm1228, %v1233, %v1232
      %vm1235 = vcmp.lt.s32.totalorder %v1123, 0
      %v1236 = vsub.s32 0, %v1123
      %v1237 = vsel %vm1235, %v1236, %v1123
      %v1238 = vshrl.u32 %v1237, 4
      %v1239 = vand.u32 %v1237, 15
      %v1240 = vsub.s32 0, %v1239
      %v1241 = vsel %vm1235, %v1240, %v1239
      %vm1242 = vcmp.lt.s32.totalorder %v1124, 0
      %v1243 = vsub.s32 0, %v1124
      %v1244 = vsel %vm1242, %v1243, %v1124
      %v1245 = vshrl.u32 %v1244, 4
      %v1246 = vand.u32 %v1244, 15
      %v1247 = vsub.s32 0, %v1246
      %v1248 = vsel %vm1242, %v1247, %v1246
      %vm1249 = vcmp.lt.s32.totalorder %v1125, 0
      %v1250 = vsub.s32 0, %v1125
      %v1251 = vsel %vm1249, %v1250, %v1125
      %v1252 = vshrl.u32 %v1251, 4
      %v1253 = vand.u32 %v1251, 15
      %v1254 = vsub.s32 0, %v1253
      %v1255 = vsel %vm1249, %v1254, %v1253
      %vm1256 = vcmp.lt.s32.totalorder %v1126, 0
      %v1257 = vsub.s32 0, %v1126
      %v1258 = vsel %vm1256, %v1257, %v1126
      %v1259 = vshrl.u32 %v1258, 4
      %v1260 = vand.u32 %v1258, 15
      %v1261 = vsub.s32 0, %v1260
      %v1262 = vsel %vm1256, %v1261, %v1260
      %vm1263 = vcmp.lt.s32.totalorder %v1127, 0
      %v1264 = vsub.s32 0, %v1127
      %v1265 = vsel %vm1263, %v1264, %v1127
      %v1266 = vshrl.u32 %v1265, 4
      %v1267 = vand.u32 %v1265, 15
      %v1268 = vsub.s32 0, %v1267
      %v1269 = vsel %vm1263, %v1268, %v1267
      %vm1270 = vcmp.lt.s32.totalorder %v1128, 0
      %v1271 = vsub.s32 0, %v1128
      %v1272 = vsel %vm1270, %v1271, %v1128
      %v1273 = vshrl.u32 %v1272, 4
      %v1274 = vand.u32 %v1272, 15
      %v1275 = vsub.s32 0, %v1274
      %v1276 = vsel %vm1270, %v1275, %v1274
      %vm1277 = vcmp.lt.s32.totalorder %v1129, 0
      %v1278 = vsub.s32 0, %v1129
      %v1279 = vsel %vm1277, %v1278, %v1129
      %v1280 = vshrl.u32 %v1279, 4
      %v1281 = vand.u32 %v1279, 15
      %v1282 = vsub.s32 0, %v1281
      %v1283 = vsel %vm1277, %v1282, %v1281
      %vm1284 = vcmp.lt.s32.totalorder %v1130, 0
      %v1285 = vsub.s32 0, %v1130
      %v1286 = vsel %vm1284, %v1285, %v1130
      %v1287 = vshrl.u32 %v1286, 4
      %v1288 = vand.u32 %v1286, 15
      %v1289 = vsub.s32 0, %v1288
      %v1290 = vsel %vm1284, %v1289, %v1288
      %vm1291 = vcmp.lt.s32.totalorder %v1131, 0
      %v1292 = vsub.s32 0, %v1131
      %v1293 = vsel %vm1291, %v1292, %v1131
      %v1294 = vshrl.u32 %v1293, 4
      %v1295 = vand.u32 %v1293, 15
      %v1296 = vsub.s32 0, %v1295
      %v1297 = vsel %vm1291, %v1296, %v1295
      %vm1298 = vcmp.lt.s32.totalorder %v1132, 0
      %v1299 = vsub.s32 0, %v1132
      %v1300 = vsel %vm1298, %v1299, %v1132
      %v1301 = vshrl.u32 %v1300, 4
      %v1302 = vand.u32 %v1300, 15
      %v1303 = vsub.s32 0, %v1302
      %v1304 = vsel %vm1298, %v1303, %v1302
      %vm1305 = vcmp.lt.s32.totalorder %v1133, 0
      %v1306 = vsub.s32 0, %v1133
      %v1307 = vsel %vm1305, %v1306, %v1133
      %v1308 = vshrl.u32 %v1307, 4
      %v1309 = vand.u32 %v1307, 15
      %v1310 = vsub.s32 0, %v1309
      %v1311 = vsel %vm1305, %v1310, %v1309
      %vm1312 = vcmp.lt.s32.totalorder %v1134, 0
      %v1313 = vsub.s32 0, %v1134
      %v1314 = vsel %vm1312, %v1313, %v1134
      %v1315 = vshrl.u32 %v1314, 4
      %v1316 = vand.u32 %v1314, 15
      %v1317 = vsub.s32 0, %v1316
      %v1318 = vsel %vm1312, %v1317, %v1316
      %vm1319 = vcmp.lt.s32.totalorder %v1135, 0
      %v1320 = vsub.s32 0, %v1135
      %v1321 = vsel %vm1319, %v1320, %v1135
      %v1322 = vshrl.u32 %v1321, 4
      %v1323 = vand.u32 %v1321, 15
      %v1324 = vsub.s32 0, %v1323
      %v1325 = vsel %vm1319, %v1324, %v1323
      %vm1326 = vcmp.lt.s32.totalorder %v1136, 0
      %v1327 = vsub.s32 0, %v1136
      %v1328 = vsel %vm1326, %v1327, %v1136
      %v1329 = vshrl.u32 %v1328, 4
      %v1330 = vand.u32 %v1328, 15
      %v1331 = vsub.s32 0, %v1330
      %v1332 = vsel %vm1326, %v1331, %v1330
      %vm1333 = vcmp.ne.s32.totalorder %v1143, 0
      %vm1334 = vcmp.ne.s32.totalorder %v1150, 0
      %vm1335 = vcmp.ne.s32.totalorder %v1157, 0
      %vm1336 = vcmp.ne.s32.totalorder %v1164, 0
      %vm1337 = vcmp.ne.s32.totalorder %v1171, 0
      %vm1338 = vcmp.ne.s32.totalorder %v1178, 0
      %vm1339 = vcmp.ne.s32.totalorder %v1185, 0
      %vm1340 = vcmp.ne.s32.totalorder %v1192, 0
      %vm1341 = vcmp.ne.s32.totalorder %v1199, 0
      %vm1342 = vcmp.ne.s32.totalorder %v1206, 0
      %vm1343 = vcmp.ne.s32.totalorder %v1213, 0
      %vm1344 = vcmp.ne.s32.totalorder %v1220, 0
      %vm1345 = vcmp.ne.s32.totalorder %v1227, 0
      %vm1346 = vcmp.ne.s32.totalorder %v1234, 0
      %vm1347 = vcmp.ne.s32.totalorder %v1241, 0
      %vm1348 = vcmp.ne.s32.totalorder %v1248, 0
      %vm1349 = vcmp.ne.s32.totalorder %v1255, 0
      %vm1350 = vcmp.ne.s32.totalorder %v1262, 0
      %vm1351 = vcmp.ne.s32.totalorder %v1269, 0
      %vm1352 = vcmp.ne.s32.totalorder %v1276, 0
      %vm1353 = vcmp.ne.s32.totalorder %v1283, 0
      %vm1354 = vcmp.ne.s32.totalorder %v1290, 0
      %vm1355 = vcmp.ne.s32.totalorder %v1297, 0
      %vm1356 = vcmp.ne.s32.totalorder %v1304, 0
      %vm1357 = vcmp.ne.s32.totalorder %v1311, 0
      %vm1358 = vcmp.ne.s32.totalorder %v1318, 0
      %vm1359 = vcmp.ne.s32.totalorder %v1325, 0
      %vm1360 = vcmp.ne.s32.totalorder %v1332, 0
      %vm1361 = vcmp.lt.s32.totalorder %v1143, 0
      %vm1362 = vcmp.lt.s32.totalorder %v1150, 0
      %vm1363 = vcmp.lt.s32.totalorder %v1157, 0
      %vm1364 = vcmp.lt.s32.totalorder %v1164, 0
      %vm1365 = vcmp.lt.s32.totalorder %v1171, 0
      %vm1366 = vcmp.lt.s32.totalorder %v1178, 0
      %vm1367 = vcmp.lt.s32.totalorder %v1185, 0
      %vm1368 = vcmp.lt.s32.totalorder %v1192, 0
      %vm1369 = vcmp.lt.s32.totalorder %v1199, 0
      %vm1370 = vcmp.lt.s32.totalorder %v1206, 0
      %vm1371 = vcmp.lt.s32.totalorder %v1213, 0
      %vm1372 = vcmp.lt.s32.totalorder %v1220, 0
      %vm1373 = vcmp.lt.s32.totalorder %v1227, 0
      %vm1374 = vcmp.lt.s32.totalorder %v1234, 0
      %vm1375 = vcmp.lt.s32.totalorder %v1241, 0
      %vm1376 = vcmp.lt.s32.totalorder %v1248, 0
      %vm1377 = vcmp.lt.s32.totalorder %v1255, 0
      %vm1378 = vcmp.lt.s32.totalorder %v1262, 0
      %vm1379 = vcmp.lt.s32.totalorder %v1269, 0
      %vm1380 = vcmp.lt.s32.totalorder %v1276, 0
      %vm1381 = vcmp.lt.s32.totalorder %v1283, 0
      %vm1382 = vcmp.lt.s32.totalorder %v1290, 0
      %vm1383 = vcmp.lt.s32.totalorder %v1297, 0
      %vm1384 = vcmp.lt.s32.totalorder %v1304, 0
      %vm1385 = vcmp.lt.s32.totalorder %v1311, 0
      %vm1386 = vcmp.lt.s32.totalorder %v1318, 0
      %vm1387 = vcmp.lt.s32.totalorder %v1325, 0
      %vm1388 = vcmp.lt.s32.totalorder %v1332, 0
      %vm1389 = vmand %vm1361, %vm1333
      %vm1390 = vmand %vm1362, %vm1334
      %vm1391 = vmand %vm1363, %vm1335
      %vm1392 = vmand %vm1364, %vm1336
      %vm1393 = vmand %vm1365, %vm1337
      %vm1394 = vmand %vm1366, %vm1338
      %vm1395 = vmand %vm1367, %vm1339
      %vm1396 = vmand %vm1368, %vm1340
      %vm1397 = vmand %vm1369, %vm1341
      %vm1398 = vmand %vm1370, %vm1342
      %vm1399 = vmand %vm1371, %vm1343
      %vm1400 = vmand %vm1372, %vm1344
      %vm1401 = vmand %vm1373, %vm1345
      %vm1402 = vmand %vm1374, %vm1346
      %vm1403 = vmand %vm1375, %vm1347
      %vm1404 = vmand %vm1376, %vm1348
      %vm1405 = vmand %vm1377, %vm1349
      %vm1406 = vmand %vm1378, %vm1350
      %vm1407 = vmand %vm1379, %vm1351
      %vm1408 = vmand %vm1380, %vm1352
      %vm1409 = vmand %vm1381, %vm1353
      %vm1410 = vmand %vm1382, %vm1354
      %vm1411 = vmand %vm1383, %vm1355
      %vm1412 = vmand %vm1384, %vm1356
      %vm1413 = vmand %vm1385, %vm1357
      %vm1414 = vmand %vm1386, %vm1358
      %vm1415 = vmand %vm1387, %vm1359
      %vm1416 = vmand %vm1388, %vm1360
      %v1417 = vadd.s32 %v1143, 16
      %v1418 = vadd.s32 %v1150, 16
      %v1419 = vadd.s32 %v1157, 16
      %v1420 = vadd.s32 %v1164, 16
      %v1421 = vadd.s32 %v1171, 16
      %v1422 = vadd.s32 %v1178, 16
      %v1423 = vadd.s32 %v1185, 16
      %v1424 = vadd.s32 %v1192, 16
      %v1425 = vadd.s32 %v1199, 16
      %v1426 = vadd.s32 %v1206, 16
      %v1427 = vadd.s32 %v1213, 16
      %v1428 = vadd.s32 %v1220, 16
      %v1429 = vadd.s32 %v1227, 16
      %v1430 = vadd.s32 %v1234, 16
      %v1431 = vadd.s32 %v1241, 16
      %v1432 = vadd.s32 %v1248, 16
      %v1433 = vadd.s32 %v1255, 16
      %v1434 = vadd.s32 %v1262, 16
      %v1435 = vadd.s32 %v1269, 16
      %v1436 = vadd.s32 %v1276, 16
      %v1437 = vadd.s32 %v1283, 16
      %v1438 = vadd.s32 %v1290, 16
      %v1439 = vadd.s32 %v1297, 16
      %v1440 = vadd.s32 %v1304, 16
      %v1441 = vadd.s32 %v1311, 16
      %v1442 = vadd.s32 %v1318, 16
      %v1443 = vadd.s32 %v1325, 16
      %v1444 = vadd.s32 %v1332, 16
      %v1445 = vsel %vm1389, %v1417, %v1143
      %v1446 = vsel %vm1390, %v1418, %v1150
      %v1447 = vsel %vm1391, %v1419, %v1157
      %v1448 = vsel %vm1392, %v1420, %v1164
      %v1449 = vsel %vm1393, %v1421, %v1171
      %v1450 = vsel %vm1394, %v1422, %v1178
      %v1451 = vsel %vm1395, %v1423, %v1185
      %v1452 = vsel %vm1396, %v1424, %v1192
      %v1453 = vsel %vm1397, %v1425, %v1199
      %v1454 = vsel %vm1398, %v1426, %v1206
      %v1455 = vsel %vm1399, %v1427, %v1213
      %v1456 = vsel %vm1400, %v1428, %v1220
      %v1457 = vsel %vm1401, %v1429, %v1227
      %v1458 = vsel %vm1402, %v1430, %v1234
      %v1459 = vsel %vm1403, %v1431, %v1241
      %v1460 = vsel %vm1404, %v1432, %v1248
      %v1461 = vsel %vm1405, %v1433, %v1255
      %v1462 = vsel %vm1406, %v1434, %v1262
      %v1463 = vsel %vm1407, %v1435, %v1269
      %v1464 = vsel %vm1408, %v1436, %v1276
      %v1465 = vsel %vm1409, %v1437, %v1283
      %v1466 = vsel %vm1410, %v1438, %v1290
      %v1467 = vsel %vm1411, %v1439, %v1297
      %v1468 = vsel %vm1412, %v1440, %v1304
      %v1469 = vsel %vm1413, %v1441, %v1311
      %v1470 = vsel %vm1414, %v1442, %v1318
      %v1471 = vsel %vm1415, %v1443, %v1325
      %v1472 = vsel %vm1416, %v1444, %v1332
      %vm1473 = vcmp.lt.s32.totalorder %v1445, 14
      %vm1474 = vcmp.lt.s32.totalorder %v1446, 14
      %vm1475 = vcmp.lt.s32.totalorder %v1447, 14
      %vm1476 = vcmp.lt.s32.totalorder %v1448, 14
      %vm1477 = vcmp.lt.s32.totalorder %v1449, 14
      %vm1478 = vcmp.lt.s32.totalorder %v1450, 14
      %vm1479 = vcmp.lt.s32.totalorder %v1451, 14
      %vm1480 = vcmp.lt.s32.totalorder %v1452, 14
      %vm1481 = vcmp.lt.s32.totalorder %v1453, 14
      %vm1482 = vcmp.lt.s32.totalorder %v1454, 14
      %vm1483 = vcmp.lt.s32.totalorder %v1455, 14
      %vm1484 = vcmp.lt.s32.totalorder %v1456, 14
      %vm1485 = vcmp.lt.s32.totalorder %v1457, 14
      %vm1486 = vcmp.lt.s32.totalorder %v1458, 14
      %vm1487 = vcmp.lt.s32.totalorder %v1459, 14
      %vm1488 = vcmp.lt.s32.totalorder %v1460, 14
      %vm1489 = vcmp.lt.s32.totalorder %v1461, 14
      %vm1490 = vcmp.lt.s32.totalorder %v1462, 14
      %vm1491 = vcmp.lt.s32.totalorder %v1463, 14
      %vm1492 = vcmp.lt.s32.totalorder %v1464, 14
      %vm1493 = vcmp.lt.s32.totalorder %v1465, 14
      %vm1494 = vcmp.lt.s32.totalorder %v1466, 14
      %vm1495 = vcmp.lt.s32.totalorder %v1467, 14
      %vm1496 = vcmp.lt.s32.totalorder %v1468, 14
      %vm1497 = vcmp.lt.s32.totalorder %v1469, 14
      %vm1498 = vcmp.lt.s32.totalorder %v1470, 14
      %vm1499 = vcmp.lt.s32.totalorder %v1471, 14
      %vm1500 = vcmp.lt.s32.totalorder %v1472, 14
      %v1501 = vsel %vm1473, %v1039, -1e+30
      %v1502 = vsel %vm1474, %v1041, -1e+30
      %v1503 = vsel %vm1475, %v1044, -1e+30
      %v1504 = vsel %vm1476, %v1046, -1e+30
      %v1505 = vsel %vm1477, %v1049, -1e+30
      %v1506 = vsel %vm1478, %v1051, -1e+30
      %v1507 = vsel %vm1479, %v1054, -1e+30
      %v1508 = vsel %vm1480, %v1056, -1e+30
      %v1509 = vsel %vm1481, %v1059, -1e+30
      %v1510 = vsel %vm1482, %v1061, -1e+30
      %v1511 = vsel %vm1483, %v1064, -1e+30
      %v1512 = vsel %vm1484, %v1066, -1e+30
      %v1513 = vsel %vm1485, %v1069, -1e+30
      %v1514 = vsel %vm1486, %v1071, -1e+30
      %v1515 = vsel %vm1487, %v1074, -1e+30
      %v1516 = vsel %vm1488, %v1076, -1e+30
      %v1517 = vsel %vm1489, %v1079, -1e+30
      %v1518 = vsel %vm1490, %v1081, -1e+30
      %v1519 = vsel %vm1491, %v1084, -1e+30
      %v1520 = vsel %vm1492, %v1086, -1e+30
      %v1521 = vsel %vm1493, %v1089, -1e+30
      %v1522 = vsel %vm1494, %v1091, -1e+30
      %v1523 = vsel %vm1495, %v1094, -1e+30
      %v1524 = vsel %vm1496, %v1096, -1e+30
      %v1525 = vsel %vm1497, %v1099, -1e+30
      %v1526 = vsel %vm1498, %v1101, -1e+30
      %v1527 = vsel %vm1499, %v1104, -1e+30
      %v1528 = vsel %vm1500, %v1106, -1e+30
      %1529 = vst.msk [vmem:[#allocation2] sm:$0xff] %vm947, -1e+30
      %1530 = vst.msk [vmem:[#allocation2 + $0x8] sm:$0xff] %vm947, -1e+30
      %1531 = vst.msk [vmem:[#allocation2 + $0x10] sm:$0xff] %vm947, -1e+30
      %1532 = vst.msk [vmem:[#allocation2 + $0xf8] sm:$0xff] %vm947, -1e+30
      %1533 = vst.msk [vmem:[#allocation2 + $0x100] sm:$0xff] %vm947, -1e+30
      %1534 = vst.msk [vmem:[#allocation2 + $0x108] sm:$0xff] %vm947, -1e+30
      %1535 = vst.msk [vmem:[#allocation2 + $0x18] sm:$0xff] %vm947, %v1501
      %1536 = vst.msk [vmem:[#allocation2 + $0x20] sm:$0xff] %vm947, %v1502
      %1537 = vst.msk [vmem:[#allocation2 + $0x28] sm:$0xff] %vm947, %v1503
      %1538 = vst.msk [vmem:[#allocation2 + $0x30] sm:$0xff] %vm947, %v1504
      %1539 = vst.msk [vmem:[#allocation2 + $0x38] sm:$0xff] %vm947, %v1505
      %1540 = vst.msk [vmem:[#allocation2 + $0x40] sm:$0xff] %vm947, %v1506
      %1541 = vst.msk [vmem:[#allocation2 + $0x48] sm:$0xff] %vm947, %v1507
      %1542 = vst.msk [vmem:[#allocation2 + $0x50] sm:$0xff] %vm947, %v1508
      %1543 = vst.msk [vmem:[#allocation2 + $0x58] sm:$0xff] %vm947, %v1509
      %1544 = vst.msk [vmem:[#allocation2 + $0x60] sm:$0xff] %vm947, %v1510
      %1545 = vst.msk [vmem:[#allocation2 + $0x68] sm:$0xff] %vm947, %v1511
      %1546 = vst.msk [vmem:[#allocation2 + $0x70] sm:$0xff] %vm947, %v1512
      %1547 = vst.msk [vmem:[#allocation2 + $0x78] sm:$0xff] %vm947, %v1513
      %1548 = vst.msk [vmem:[#allocation2 + $0x80] sm:$0xff] %vm947, %v1514
      %1549 = vst.msk [vmem:[#allocation2 + $0x88] sm:$0xff] %vm947, %v1515
      %1550 = vst.msk [vmem:[#allocation2 + $0x90] sm:$0xff] %vm947, %v1516
      %1551 = vst.msk [vmem:[#allocation2 + $0x98] sm:$0xff] %vm947, %v1517
      %1552 = vst.msk [vmem:[#allocation2 + $0xa0] sm:$0xff] %vm947, %v1518
      %1553 = vst.msk [vmem:[#allocation2 + $0xa8] sm:$0xff] %vm947, %v1519
      %1554 = vst.msk [vmem:[#allocation2 + $0xb0] sm:$0xff] %vm947, %v1520
      %1555 = vst.msk [vmem:[#allocation2 + $0xb8] sm:$0xff] %vm947, %v1521
      %1556 = vst.msk [vmem:[#allocation2 + $0xc0] sm:$0xff] %vm947, %v1522
      %1557 = vst.msk [vmem:[#allocation2 + $0xc8] sm:$0xff] %vm947, %v1523
      %1558 = vst.msk [vmem:[#allocation2 + $0xd0] sm:$0xff] %vm947, %v1524
      %1559 = vst.msk [vmem:[#allocation2 + $0xd8] sm:$0xff] %vm947, %v1525
      %1560 = vst.msk [vmem:[#allocation2 + $0xe0] sm:$0xff] %vm947, %v1526
      %1561 = vst.msk [vmem:[#allocation2 + $0xe8] sm:$0xff] %vm947, %v1527
      %1562 = vst.msk [vmem:[#allocation2 + $0xf0] sm:$0xff] %vm947, %v1528
      %v1563 = vld [vmem:[#allocation2 + $0x7] sm:$0xff]
      %v1564 = vld [vmem:[#allocation2 + $0xf] sm:$0xff]
      %v1565 = vld [vmem:[#allocation2 + $0x17] sm:$0xff]
      %v1566 = vld [vmem:[#allocation2 + $0x1f] sm:$0xff]
      %v1567 = vld [vmem:[#allocation2 + $0x27] sm:$0xff]
      %v1568 = vld [vmem:[#allocation2 + $0x2f] sm:$0xff]
      %v1569 = vld [vmem:[#allocation2 + $0x37] sm:$0xff]
      %v1570 = vld [vmem:[#allocation2 + $0x3f] sm:$0xff]
      %v1571 = vld [vmem:[#allocation2 + $0x47] sm:$0xff]
      %v1572 = vld [vmem:[#allocation2 + $0x4f] sm:$0xff]
      %v1573 = vld [vmem:[#allocation2 + $0x57] sm:$0xff]
      %v1574 = vld [vmem:[#allocation2 + $0x5f] sm:$0xff]
      %v1575 = vld [vmem:[#allocation2 + $0x67] sm:$0xff]
      %v1576 = vld [vmem:[#allocation2 + $0x6f] sm:$0xff]
      %v1577 = vld [vmem:[#allocation2 + $0x77] sm:$0xff]
      %v1578 = vld [vmem:[#allocation2 + $0x7f] sm:$0xff]
      %v1579 = vld [vmem:[#allocation2 + $0x87] sm:$0xff]
      %v1580 = vld [vmem:[#allocation2 + $0x8f] sm:$0xff]
      %v1581 = vld [vmem:[#allocation2 + $0x97] sm:$0xff]
      %v1582 = vld [vmem:[#allocation2 + $0x9f] sm:$0xff]
      %v1583 = vld [vmem:[#allocation2 + $0xa7] sm:$0xff]
      %v1584 = vld [vmem:[#allocation2 + $0xaf] sm:$0xff]
      %v1585 = vld [vmem:[#allocation2 + $0xb7] sm:$0xff]
      %v1586 = vld [vmem:[#allocation2 + $0xbf] sm:$0xff]
      %v1587 = vld [vmem:[#allocation2 + $0xc7] sm:$0xff]
      %v1588 = vld [vmem:[#allocation2 + $0xcf] sm:$0xff]
      %v1589 = vld [vmem:[#allocation2 + $0xd7] sm:$0xff]
      %v1590 = vld [vmem:[#allocation2 + $0xdf] sm:$0xff]
      %v1591 = vld [vmem:[#allocation2 + $0xe7] sm:$0xff]
      %v1592 = vld [vmem:[#allocation2 + $0xef] sm:$0xff]
      %v1593 = vld [vmem:[#allocation2 + $0xf7] sm:$0xff]
      %v1594 = vld [vmem:[#allocation2 + $0xff] sm:$0xff]
      %v1595 = vld [vmem:[#allocation2 + $0x8] sm:$0xff]
      %v1596 = vld [vmem:[#allocation2 + $0x10] sm:$0xff]
      %v1597 = vld [vmem:[#allocation2 + $0x18] sm:$0xff]
      %v1598 = vld [vmem:[#allocation2 + $0x20] sm:$0xff]
      %v1599 = vld [vmem:[#allocation2 + $0x28] sm:$0xff]
      %v1600 = vld [vmem:[#allocation2 + $0x30] sm:$0xff]
      %v1601 = vld [vmem:[#allocation2 + $0x38] sm:$0xff]
      %v1602 = vld [vmem:[#allocation2 + $0x40] sm:$0xff]
      %v1603 = vld [vmem:[#allocation2 + $0x48] sm:$0xff]
      %v1604 = vld [vmem:[#allocation2 + $0x50] sm:$0xff]
      %v1605 = vld [vmem:[#allocation2 + $0x58] sm:$0xff]
      %v1606 = vld [vmem:[#allocation2 + $0x60] sm:$0xff]
      %v1607 = vld [vmem:[#allocation2 + $0x68] sm:$0xff]
      %v1608 = vld [vmem:[#allocation2 + $0x70] sm:$0xff]
      %v1609 = vld [vmem:[#allocation2 + $0x78] sm:$0xff]
      %v1610 = vld [vmem:[#allocation2 + $0x80] sm:$0xff]
      %v1611 = vld [vmem:[#allocation2 + $0x88] sm:$0xff]
      %v1612 = vld [vmem:[#allocation2 + $0x90] sm:$0xff]
      %v1613 = vld [vmem:[#allocation2 + $0x98] sm:$0xff]
      %v1614 = vld [vmem:[#allocation2 + $0xa0] sm:$0xff]
      %v1615 = vld [vmem:[#allocation2 + $0xa8] sm:$0xff]
      %v1616 = vld [vmem:[#allocation2 + $0xb0] sm:$0xff]
      %v1617 = vld [vmem:[#allocation2 + $0xb8] sm:$0xff]
      %v1618 = vld [vmem:[#allocation2 + $0xc0] sm:$0xff]
      %v1619 = vld [vmem:[#allocation2 + $0xc8] sm:$0xff]
      %v1620 = vld [vmem:[#allocation2 + $0xd0] sm:$0xff]
      %v1621 = vld [vmem:[#allocation2 + $0xd8] sm:$0xff]
      %v1622 = vld [vmem:[#allocation2 + $0xe0] sm:$0xff]
      %v1623 = vld [vmem:[#allocation2 + $0xe8] sm:$0xff]
      %v1624 = vld [vmem:[#allocation2 + $0xf0] sm:$0xff]
      %v1625 = vld [vmem:[#allocation2 + $0xf8] sm:$0xff]
      %v1626 = vld [vmem:[#allocation2 + $0x100] sm:$0xff]
      %v1627 = vld [vmem:[#allocation2 + $0x9] sm:$0xff]
      %v1628 = vld [vmem:[#allocation2 + $0x11] sm:$0xff]
      %v1629 = vld [vmem:[#allocation2 + $0x19] sm:$0xff]
      %v1630 = vld [vmem:[#allocation2 + $0x21] sm:$0xff]
      %v1631 = vld [vmem:[#allocation2 + $0x29] sm:$0xff]
      %v1632 = vld [vmem:[#allocation2 + $0x31] sm:$0xff]
      %v1633 = vld [vmem:[#allocation2 + $0x39] sm:$0xff]
      %v1634 = vld [vmem:[#allocation2 + $0x41] sm:$0xff]
      %v1635 = vld [vmem:[#allocation2 + $0x49] sm:$0xff]
      %v1636 = vld [vmem:[#allocation2 + $0x51] sm:$0xff]
      %v1637 = vld [vmem:[#allocation2 + $0x59] sm:$0xff]
      %v1638 = vld [vmem:[#allocation2 + $0x61] sm:$0xff]
      %v1639 = vld [vmem:[#allocation2 + $0x69] sm:$0xff]
      %v1640 = vld [vmem:[#allocation2 + $0x71] sm:$0xff]
      %v1641 = vld [vmem:[#allocation2 + $0x79] sm:$0xff]
      %v1642 = vld [vmem:[#allocation2 + $0x81] sm:$0xff]
      %v1643 = vld [vmem:[#allocation2 + $0x89] sm:$0xff]
      %v1644 = vld [vmem:[#allocation2 + $0x91] sm:$0xff]
      %v1645 = vld [vmem:[#allocation2 + $0x99] sm:$0xff]
      %v1646 = vld [vmem:[#allocation2 + $0xa1] sm:$0xff]
      %v1647 = vld [vmem:[#allocation2 + $0xa9] sm:$0xff]
      %v1648 = vld [vmem:[#allocation2 + $0xb1] sm:$0xff]
      %v1649 = vld [vmem:[#allocation2 + $0xb9] sm:$0xff]
      %v1650 = vld [vmem:[#allocation2 + $0xc1] sm:$0xff]
      %v1651 = vld [vmem:[#allocation2 + $0xc9] sm:$0xff]
      %v1652 = vld [vmem:[#allocation2 + $0xd1] sm:$0xff]
      %v1653 = vld [vmem:[#allocation2 + $0xd9] sm:$0xff]
      %v1654 = vld [vmem:[#allocation2 + $0xe1] sm:$0xff]
      %v1655 = vld [vmem:[#allocation2 + $0xe9] sm:$0xff]
      %v1656 = vld [vmem:[#allocation2 + $0xf1] sm:$0xff]
      %v1657 = vld [vmem:[#allocation2 + $0xf9] sm:$0xff]
      %v1658 = vld [vmem:[#allocation2 + $0x101] sm:$0xff]
      %v1659 = vmax.f32 %v1563, %v1595
      %v1660 = vmax.f32 %v1564, %v1596
      %v1661 = vmax.f32 %v1565, %v1597
      %v1662 = vmax.f32 %v1566, %v1598
      %v1663 = vmax.f32 %v1567, %v1599
      %v1664 = vmax.f32 %v1568, %v1600
      %v1665 = vmax.f32 %v1569, %v1601
      %v1666 = vmax.f32 %v1570, %v1602
      %v1667 = vmax.f32 %v1571, %v1603
      %v1668 = vmax.f32 %v1572, %v1604
      %v1669 = vmax.f32 %v1573, %v1605
      %v1670 = vmax.f32 %v1574, %v1606
      %v1671 = vmax.f32 %v1575, %v1607
      %v1672 = vmax.f32 %v1576, %v1608
      %v1673 = vmax.f32 %v1577, %v1609
      %v1674 = vmax.f32 %v1578, %v1610
      %v1675 = vmax.f32 %v1579, %v1611
      %v1676 = vmax.f32 %v1580, %v1612
      %v1677 = vmax.f32 %v1581, %v1613
      %v1678 = vmax.f32 %v1582, %v1614
      %v1679 = vmax.f32 %v1583, %v1615
      %v1680 = vmax.f32 %v1584, %v1616
      %v1681 = vmax.f32 %v1585, %v1617
      %v1682 = vmax.f32 %v1586, %v1618
      %v1683 = vmax.f32 %v1587, %v1619
      %v1684 = vmax.f32 %v1588, %v1620
      %v1685 = vmax.f32 %v1589, %v1621
      %v1686 = vmax.f32 %v1590, %v1622
      %v1687 = vmax.f32 %v1591, %v1623
      %v1688 = vmax.f32 %v1592, %v1624
      %v1689 = vmax.f32 %v1593, %v1625
      %v1690 = vmax.f32 %v1594, %v1626
      %v1691 = vmax.f32 %v1659, %v1627
      %v1692 = vmax.f32 %v1660, %v1628
      %v1693 = vmax.f32 %v1661, %v1629
      %v1694 = vmax.f32 %v1662, %v1630
      %v1695 = vmax.f32 %v1663, %v1631
      %v1696 = vmax.f32 %v1664, %v1632
      %v1697 = vmax.f32 %v1665, %v1633
      %v1698 = vmax.f32 %v1666, %v1634
      %v1699 = vmax.f32 %v1667, %v1635
      %v1700 = vmax.f32 %v1668, %v1636
      %v1701 = vmax.f32 %v1669, %v1637
      %v1702 = vmax.f32 %v1670, %v1638
      %v1703 = vmax.f32 %v1671, %v1639
      %v1704 = vmax.f32 %v1672, %v1640
      %v1705 = vmax.f32 %v1673, %v1641
      %v1706 = vmax.f32 %v1674, %v1642
      %v1707 = vmax.f32 %v1675, %v1643
      %v1708 = vmax.f32 %v1676, %v1644
      %v1709 = vmax.f32 %v1677, %v1645
      %v1710 = vmax.f32 %v1678, %v1646
      %v1711 = vmax.f32 %v1679, %v1647
      %v1712 = vmax.f32 %v1680, %v1648
      %v1713 = vmax.f32 %v1681, %v1649
      %v1714 = vmax.f32 %v1682, %v1650
      %v1715 = vmax.f32 %v1683, %v1651
      %v1716 = vmax.f32 %v1684, %v1652
      %v1717 = vmax.f32 %v1685, %v1653
      %v1718 = vmax.f32 %v1686, %v1654
      %v1719 = vmax.f32 %v1687, %v1655
      %v1720 = vmax.f32 %v1688, %v1656
      %v1721 = vmax.f32 %v1689, %v1657
      %v1722 = vmax.f32 %v1690, %v1658
      %1723 = vst.msk [vmem:[#allocation3] sm:$0xff] %vm947, %v1691
      %1724 = vst.msk [vmem:[#allocation3 + $0x8] sm:$0xff] %vm947, %v1692
      %1725 = vst.msk [vmem:[#allocation3 + $0x10] sm:$0xff] %vm947, %v1693
      %1726 = vst.msk [vmem:[#allocation3 + $0x18] sm:$0xff] %vm947, %v1694
      %1727 = vst.msk [vmem:[#allocation3 + $0x20] sm:$0xff] %vm947, %v1695
      %1728 = vst.msk [vmem:[#allocation3 + $0x28] sm:$0xff] %vm947, %v1696
      %1729 = vst.msk [vmem:[#allocation3 + $0x30] sm:$0xff] %vm947, %v1697
      %1730 = vst.msk [vmem:[#allocation3 + $0x38] sm:$0xff] %vm947, %v1698
      %1731 = vst.msk [vmem:[#allocation3 + $0x40] sm:$0xff] %vm947, %v1699
      %1732 = vst.msk [vmem:[#allocation3 + $0x48] sm:$0xff] %vm947, %v1700
      %1733 = vst.msk [vmem:[#allocation3 + $0x50] sm:$0xff] %vm947, %v1701
      %1734 = vst.msk [vmem:[#allocation3 + $0x58] sm:$0xff] %vm947, %v1702
      %1735 = vst.msk [vmem:[#allocation3 + $0x60] sm:$0xff] %vm947, %v1703
      %1736 = vst.msk [vmem:[#allocation3 + $0x68] sm:$0xff] %vm947, %v1704
      %1737 = vst.msk [vmem:[#allocation3 + $0x70] sm:$0xff] %vm947, %v1705
      %1738 = vst.msk [vmem:[#allocation3 + $0x78] sm:$0xff] %vm947, %v1706
      %1739 = vst.msk [vmem:[#allocation3 + $0x80] sm:$0xff] %vm947, %v1707
      %1740 = vst.msk [vmem:[#allocation3 + $0x88] sm:$0xff] %vm947, %v1708
      %1741 = vst.msk [vmem:[#allocation3 + $0x90] sm:$0xff] %vm947, %v1709
      %1742 = vst.msk [vmem:[#allocation3 + $0x98] sm:$0xff] %vm947, %v1710
      %1743 = vst.msk [vmem:[#allocation3 + $0xa0] sm:$0xff] %vm947, %v1711
      %1744 = vst.msk [vmem:[#allocation3 + $0xa8] sm:$0xff] %vm947, %v1712
      %1745 = vst.msk [vmem:[#allocation3 + $0xb0] sm:$0xff] %vm947, %v1713
      %1746 = vst.msk [vmem:[#allocation3 + $0xb8] sm:$0xff] %vm947, %v1714
      %1747 = vst.msk [vmem:[#allocation3 + $0xc0] sm:$0xff] %vm947, %v1715
      %1748 = vst.msk [vmem:[#allocation3 + $0xc8] sm:$0xff] %vm947, %v1716
      %1749 = vst.msk [vmem:[#allocation3 + $0xd0] sm:$0xff] %vm947, %v1717
      %1750 = vst.msk [vmem:[#allocation3 + $0xd8] sm:$0xff] %vm947, %v1718
      %1751 = vst.msk [vmem:[#allocation3 + $0xe0] sm:$0xff] %vm947, %v1719
      %1752 = vst.msk [vmem:[#allocation3 + $0xe8] sm:$0xff] %vm947, %v1720
      %1753 = vst.msk [vmem:[#allocation3 + $0xf0] sm:$0xff] %vm947, %v1721
      %1754 = vst.msk [vmem:[#allocation3 + $0xf8] sm:$0xff] %vm947, %v1722
      %v1755 = vld [vmem:[#allocation3] ss:$2 sm:$0xff]
      %s1756 = scalar_lea.vmem [#allocation3], 32
      %v1757 = vld [vmem:[%s1756] ss:$2 sm:$0xff]
      %s1758 = scalar_lea.vmem [#allocation3], 64
      %v1759 = vld [vmem:[%s1758] ss:$2 sm:$0xff]
      %s1760 = scalar_lea.vmem [#allocation3], 96
      %v1761 = vld [vmem:[%s1760] ss:$2 sm:$0xff]
      %s1762 = scalar_lea.vmem [#allocation3], 128
      %v1763 = vld [vmem:[%s1762] ss:$2 sm:$0xff]
      %s1764 = scalar_lea.vmem [#allocation3], 160
      %v1765 = vld [vmem:[%s1764] ss:$2 sm:$0xff]
      %s1766 = scalar_lea.vmem [#allocation3], 192
      %v1767 = vld [vmem:[%s1766] ss:$2 sm:$0xff]
      %s1768 = scalar_lea.vmem [#allocation3], 16
      %v1769 = vld [vmem:[%s1768] ss:$2 sm:$0xff]
      %s1770 = scalar_lea.vmem [#allocation3], 48
      %v1771 = vld [vmem:[%s1770] ss:$2 sm:$0xff]
      %s1772 = scalar_lea.vmem [#allocation3], 80
      %v1773 = vld [vmem:[%s1772] ss:$2 sm:$0xff]
      %s1774 = scalar_lea.vmem [#allocation3], 112
      %v1775 = vld [vmem:[%s1774] ss:$2 sm:$0xff]
      %s1776 = scalar_lea.vmem [#allocation3], 144
      %v1777 = vld [vmem:[%s1776] ss:$2 sm:$0xff]
      %s1778 = scalar_lea.vmem [#allocation3], 176
      %v1779 = vld [vmem:[%s1778] ss:$2 sm:$0xff]
      %s1780 = scalar_lea.vmem [#allocation3], 208
      %v1781 = vld [vmem:[%s1780] ss:$2 sm:$0xff]
      %s1782 = scalar_lea.vmem [#allocation3], 224
      %v1783 = vld [vmem:[%s1782] ss:$2 sm:$0xff]
      %v1784 = vmax.f32 %v1755, %v1769
      %v1785 = vmax.f32 %v1757, %v1771
      %v1786 = vmax.f32 %v1759, %v1773
      %v1787 = vmax.f32 %v1761, %v1775
      %v1788 = vmax.f32 %v1763, %v1777
      %v1789 = vmax.f32 %v1765, %v1779
      %v1790 = vmax.f32 %v1767, %v1781
      %v1791 = vmax.f32 %v1784, %v1757
      %v1792 = vmax.f32 %v1785, %v1759
      %v1793 = vmax.f32 %v1786, %v1761
      %v1794 = vmax.f32 %v1787, %v1763
      %v1795 = vmax.f32 %v1788, %v1765
      %v1796 = vmax.f32 %v1789, %v1767
      %v1797 = vmax.f32 %v1790, %v1783
      %v1798 = vld [vmem:[%s2] sm:$0x1]
      %v1800 = vperm.slane %v1798, 0
      %v1802 = vmul.f32 %v1791, %v1800
      %v1803 = vmul.f32 %v1792, %v1800
      %v1804 = vmul.f32 %v1793, %v1800
      %v1805 = vmul.f32 %v1794, %v1800
      %v1806 = vmul.f32 %v1795, %v1800
      %v1807 = vmul.f32 %v1796, %v1800
      %v1808 = vmul.f32 %v1797, %v1800
      %v1809 = vld [vmem:[%s3] sm:$0x1]
      %v1811 = vperm.slane %v1809, 0
      %v1813 = vadd.f32 %v1802, %v1811
      %v1814 = vadd.f32 %v1803, %v1811
      %v1815 = vadd.f32 %v1804, %v1811
      %v1816 = vadd.f32 %v1805, %v1811
      %v1817 = vadd.f32 %v1806, %v1811
      %v1818 = vadd.f32 %v1807, %v1811
      %v1819 = vadd.f32 %v1808, %v1811
      %vm1820 = vcmask 260096
      %1821 = vst.msk [vmem:[%s197] sm:$0x7f] %vm1820, %v1813
      %1822 = vst.msk [vmem:[%s197 + $0x8] sm:$0x7f] %vm1820, %v1814
      %1823 = vst.msk [vmem:[%s197 + $0x10] sm:$0x7f] %vm1820, %v1815
      %1824 = vst.msk [vmem:[%s197 + $0x18] sm:$0x7f] %vm1820, %v1816
      %1825 = vst.msk [vmem:[%s197 + $0x20] sm:$0x7f] %vm1820, %v1817
      %1826 = vst.msk [vmem:[%s197 + $0x28] sm:$0x7f] %vm1820, %v1818
      %1827 = vst.msk [vmem:[%s197 + $0x30] sm:$0x7f] %vm1820, %v1819
      %p1828 = scmp.lt.s32.totalorder %s15, 1
      %s1829 = scalar_select %p1828, %s15, 1
      %s1830 = smul.addr %s1829, 7
      %s1831 = smul.addr %s1830, 8
      %s1832 = scalar_lea.vmem %s4, %s1831
      // Predicated region
      $region37: #{tpu_custom_call.1} parent=35 // pred_check
        %p1833 = pneg %p122
      $region38: #{tpu_custom_call.1} parent=35 // pred_check_branch
        %1835 = sbr.rel (%p1833) target = $region40
      $region39: #{tpu_custom_call.1} parent=35 // pred_region
        _
      $region40: #{tpu_custom_call.1} parent=35 // pred_fallthru
        _
    $region36: #{tpu_custom_call.1} parent=5 // pred_fallthru
      _
    %p1836 = scmp.le.s32.totalorder 2, %s10
    // Predicated region
    $region41: #{tpu_custom_call.1} parent=5 // pred_check
      %p1837 = pneg %p1836
    $region42: #{tpu_custom_call.1} parent=5 // pred_check_branch
      %1839 = sbr.rel (%p1837) target = $region44
    $region43: #{tpu_custom_call.1} parent=5 // pred_region
      %s1840 = ssub.s32 %s10, 2
      // Predicated region
      $region45: #{tpu_custom_call.1} parent=43 // pred_check
        %p1841 = pneg %p128
      $region46: #{tpu_custom_call.1} parent=43 // pred_check_branch
        %1843 = sbr.rel (%p1841) target = $region48
      $region47: #{tpu_custom_call.1} parent=43 // pred_region
        %p1844 = scmp.lt.s32.totalorder %s16, 1
        %s1845 = scalar_select %p1844, %s16, 1
        %s1846 = smul.addr %s1845, 7
        %s1847 = smul.addr %s1846, 8
        %s1848 = scalar_lea.vmem %s4, %s1847
      $region48: #{tpu_custom_call.1} parent=43 // pred_fallthru
        _
    $region44: #{tpu_custom_call.1} parent=5 // pred_fallthru
      _
  $region6: #{tpu_custom_call.1} parent=0 // loop_footer
    %s14 = sadd.s32 1, %s10
  $region7: #{tpu_custom_call.1} parent=0 // loop_footer_branch
    %9 = sbr.rel target = $region3
  $region8: #{tpu_custom_call.1} parent=0 // loop_exit
    _

</llo_original>
